<compile_context>
chip_gen: v7x
topology: tpu7x:2x2x1
jax: 0.10.0
libtpu: 0.0.40
codegen_flags: <defaults>
</compile_context>

<pallas_src>
import jax
import jax.numpy as jnp
from jax.experimental import pallas as pl
from jax.experimental.pallas import tpu as pltpu


# ---------------------------------------------------------------------------
# tiling helpers
# ---------------------------------------------------------------------------
def _pick_tile_m(hw, batch, target=2048):
    """Pixel (lane) tile: multiple of 128, <= target, preferring >= 4 total
    grid steps so each v7x TensorCore gets >= 2 pipelined steps."""
    cands = [t for t in (2048, 1024, 512, 256, 128) if t <= min(target, hw)]
    if not cands:
        return hw                       # tiny spatial extent: one block
    for t in cands:
        if batch * pl.cdiv(hw, t) >= 4:
            return t
    return cands[-1]


def _tile_spec(c, tm):
    # per-grid-step (1, C, TILE_M) block of a (B, C, Mp) channel-first tensor
    return pl.BlockSpec((1, c, tm), lambda b, i: (b, 0, i))


def _const_spec(shape):
    # grid-invariant 2-D block (weights, folded BN scale/shift)
    return pl.BlockSpec(shape, lambda b, i: (0, 0))


_CPARAMS = pltpu.CompilerParams(dimension_semantics=("parallel", "parallel"))


# ---------------------------------------------------------------------------
# Pallas kernels
# ---------------------------------------------------------------------------
def squeeze_expand1x1_kernel(x_ref, wsq_ref, sqs_ref, sqb_ref,
                             we1_ref, e1s_ref, e1b_ref,
                             s_ref, e1_ref):
    # Channel-first blocks: x is (Cin, TM) f32 read straight from NCHW.
    # Both matmuls contract over channels, so the pixel axis stays on lanes
    # and every output store is lane-dense.
    xb = x_ref[0].astype(jnp.bfloat16)                                   # (Cin, TM)
    s = jnp.dot(wsq_ref[...], xb, preferred_element_type=jnp.float32)    # (SQ, TM)
    s = jnp.maximum(s * sqs_ref[...] + sqb_ref[...], 0.0)
    s_ref[0] = s.astype(s_ref.dtype)                 # bf16, feeds the 3x3 branch
    e1 = jnp.dot(we1_ref[...], s.astype(we1_ref.dtype),
                 preferred_element_type=jnp.float32)                     # (E1, TM)
    e1_ref[0] = jnp.maximum(e1 * e1s_ref[...] + e1b_ref[...], 0.0
                            ).astype(e1_ref.dtype)


def range_expand3x3_kernel(taps_ref, dtaps_ref, e1_ref,
                           w3_ref, n1s_ref, n1b_ref, e3s_ref, e3b_ref,
                           o_ref):
    # Fused RangeConv2d (conv(s) and conv(s*d) as K=9*SQ matmuls against one
    # resident weight), range combine, expand3x3_bn + ReLU and the channel
    # concat -> one lane-dense NCHW (128, TM) store.  The depth-scaled taps
    # are built in-kernel, so they never exist in HBM.
    taps = taps_ref[0]                       # (9*SQ, TM) bf16   im2col taps of s
    dt = dtaps_ref[0]                        # (9, TM)    f32    per-tap depth
    w3 = w3_ref[...]                         # (E3, 9*SQ) bf16
    gsz = taps.shape[0] // 9                 # = SQ channels per tap group

    z = jnp.dot(w3, taps, preferred_element_type=jnp.float32)            # (E3, TM)

    # conv(s*d): scale each tap group by that tap's (neighbour-pixel) depth.
    parts = [(taps[g * gsz:(g + 1) * gsz, :].astype(jnp.float32)
              * dt[g:g + 1, :]).astype(taps.dtype) for g in range(9)]
    tapsd = jnp.concatenate(parts, axis=0)                               # (9*SQ, TM)
    zd = jnp.dot(w3, tapsd, preferred_element_type=jnp.float32)          # (E3, TM)

    # BN(norm1) + LeakyReLU(0.01) on both conv outputs, then range combine.
    c = z * n1s_ref[...] + n1b_ref[...]
    c = jnp.where(c > 0, c, 0.01 * c)
    cd = zd * n1s_ref[...] + n1b_ref[...]
    cd = jnp.where(cd > 0, cd, 0.01 * cd)
    d_center = dt[4:5, :]                    # tap (dy,dx)=(1,1) = own-pixel depth
    rc = c - jnp.abs(c * d_center - cd)

    e3 = jnp.maximum(rc * e3s_ref[...] + e3b_ref[...], 0.0)
    o_ref[0] = jnp.concatenate(
        [e1_ref[0].astype(o_ref.dtype), e3.astype(o_ref.dtype)], axis=0)


# ---------------------------------------------------------------------------
# forward wrapper
# ---------------------------------------------------------------------------
def range_fire_forward(x_nchw, depth, p, out_dtype=jnp.bfloat16):
    B, Cin, H, W = x_nchw.shape
    HW = H * W
    tm = _pick_tile_m(HW, B)
    n_m = pl.cdiv(HW, tm)
    Mp = n_m * tm
    grid = (B, n_m)

    sq = p["sq_w"].shape[0]
    e1p = p["e1_w"].shape[0]
    e3p = p["e3_w"].shape[0]

    def pad_m(a):
        return a if Mp == HW else jnp.pad(a, ((0, 0), (0, 0), (0, Mp - HW)))

    # NCHW reshaped (no transpose): (B, Cin, H*W) f32, cast to bf16 in-kernel.
    x_flat = pad_m(x_nchw.reshape(B, Cin, HW))

    # --- fused squeeze + expand1x1 ------------------------------------------
    s_flat, e1_flat = pl.pallas_call(
        squeeze_expand1x1_kernel,
        grid=grid,
        in_specs=[_tile_spec(Cin, tm),
                  _const_spec(p["sq_w"].shape),
                  _const_spec(p["sq_scale"].shape),
                  _const_spec(p["sq_shift"].shape),
                  _const_spec(p["e1_w"].shape),
                  _const_spec(p["e1_scale"].shape),
                  _const_spec(p["e1_shift"].shape)],
        out_specs=(_tile_spec(sq, tm), _tile_spec(e1p, tm)),
        out_shape=(jax.ShapeDtypeStruct((B, sq, Mp), jnp.bfloat16),
                   jax.ShapeDtypeStruct((B, e1p, Mp), jnp.bfloat16)),
        compiler_params=_CPARAMS,
    )(x_flat, p["sq_w"], p["sq_scale"], p["sq_shift"],
      p["e1_w"], p["e1_scale"], p["e1_shift"])

    # --- RangeConv2d glue: depth normalization + tap packing ----------------
    # Matches torch: depth / torch.max(depth, dim=0).values  (no zero guard,
    # identical to the reference module; depth is strictly positive here).
    depth_n = depth / jnp.max(depth, axis=0)                       # (B, H, W) f32
    s_img = s_flat[:, :, :HW].reshape(B, sq, H, W)
    s_pad = jnp.pad(s_img, ((0, 0), (0, 0), (1, 1), (1, 1)))
    d_pad = jnp.pad(depth_n, ((0, 0), (1, 1), (1, 1)))
    # TODO(synk): build these 9 taps in-kernel from a halo'd s row-tile so the
    # (B, 9*sq, HW) tensor never hits HBM (biggest remaining traffic term).
    taps = jnp.concatenate(
        [s_pad[:, :, dy:dy + H, dx:dx + W] for dy in range(3) for dx in range(3)],
        axis=1).reshape(B, 9 * sq, HW)                             # bf16
    dtaps = jnp.stack(
        [d_pad[:, dy:dy + H, dx:dx + W] for dy in range(3) for dx in range(3)],
        axis=1).reshape(B, 9, HW).astype(jnp.float32)
    taps = pad_m(taps)
    dtaps = pad_m(dtaps)

    # --- fused conv(s)/conv(s*d)/combine/expand3x3_bn/ReLU/concat -----------
    out_flat = pl.pallas_call(
        range_expand3x3_kernel,
        grid=grid,
        in_specs=[_tile_spec(9 * sq, tm),
                  _tile_spec(9, tm),
                  _tile_spec(e1p, tm),
                  _const_spec(p["e3_w"].shape),
                  _const_spec(p["e3_scale"].shape),
                  _const_spec(p["e3_shift"].shape),
                  _const_spec(p["e3bn_scale"].shape),
                  _const_spec(p["e3bn_shift"].shape)],
        out_specs=_tile_spec(e1p + e3p, tm),
        out_shape=jax.ShapeDtypeStruct((B, e1p + e3p, Mp), out_dtype),
        compiler_params=_CPARAMS,
    )(taps, dtaps, e1_flat,
      p["e3_w"], p["e3_scale"], p["e3_shift"],
      p["e3bn_scale"], p["e3bn_shift"])

    # already NCHW: just drop pixel padding and restore (H, W)
    return out_flat[:, :, :HW].reshape(B, e1p + e3p, H, W)


# ---------------------------------------------------------------------------
# deterministic synthetic parameters (inference-mode BN folded to scale/shift)
# ---------------------------------------------------------------------------
def init_conv(key, cin, cout, ksize=1):
    kw, kb = jax.random.split(key)
    fan_in = cin * ksize * ksize
    bound = 1.0 / (fan_in ** 0.5)
    # channel-first matmul weight: (cout, 9*cin) with tap-major / channel-minor
    # column order, matching the wrapper's tap packing.
    w = jax.random.uniform(kw, (cout, ksize * ksize, cin), jnp.float32,
                           -bound, bound)
    b = jax.random.uniform(kb, (cout,), jnp.float32, -bound, bound)
    return w.reshape(cout, ksize * ksize * cin).astype(jnp.bfloat16), b


def init_bn(key, c):
    k1, k2, k3, k4 = jax.random.split(key, 4)
    return dict(
        gamma=1.0 + 0.1 * jax.random.normal(k1, (c,), jnp.float32),
        beta=0.1 * jax.random.normal(k2, (c,), jnp.float32),
        mean=0.1 * jax.random.normal(k3, (c,), jnp.float32),
        var=jax.random.uniform(k4, (c,), jnp.float32, 0.5, 1.5),
    )


def fuse_bn(bn, bias=None, eps=1e-5):
    scale = bn["gamma"] / jnp.sqrt(bn["var"] + eps)
    shift = bn["beta"] - bn["mean"] * scale
    if bias is not None:
        shift = shift + bias * scale
    return scale[:, None], shift[:, None]            # (C, 1) for channel-first


def make_fire_params(key, inplanes, sq, e1p, e3p):
    ks = jax.random.split(key, 7)
    sq_w, sq_b = init_conv(ks[0], inplanes, sq)
    sq_s, sq_sh = fuse_bn(init_bn(ks[1], sq), sq_b)
    e1_w, e1_b = init_conv(ks[2], sq, e1p)
    e1_s, e1_sh = fuse_bn(init_bn(ks[3], e1p), e1_b)
    e3_w, e3_b = init_conv(ks[4], sq, e3p, ksize=3)
    e3_s, e3_sh = fuse_bn(init_bn(ks[5], e3p), e3_b)       # RangeConv2d.norm1
    e3bn_s, e3bn_sh = fuse_bn(init_bn(ks[6], e3p))         # RangeFire.expand3x3_bn
    return dict(sq_w=sq_w, sq_scale=sq_s, sq_shift=sq_sh,
                e1_w=e1_w, e1_scale=e1_s, e1_shift=e1_sh,
                e3_w=e3_w, e3_scale=e3_s, e3_shift=e3_sh,
                e3bn_scale=e3bn_s, e3bn_shift=e3bn_sh)


# ---------------------------------------------------------------------------
if __name__ == "__main__":
    key = jax.random.PRNGKey(0)
    kx, kd, kp = jax.random.split(key, 3)

    # RangeFire(inplanes=64, squeeze=16, expand1x1=64, expand3x3=64)
    B, C, H, W = 2, 64, 16, 16
    x = jax.random.normal(kx, (B, C, H, W), jnp.float32)
    depth = jax.random.uniform(kd, (B, H, W), jnp.float32, 0.1, 1.0)
    params = make_fire_params(kp, C, 16, 64, 64)

    fwd = jax.jit(lambda a, d: range_fire_forward(a, d, params))
    out = fwd(x, depth)
    jax.block_until_ready(out)
    assert out.shape == (B, 128, H, W), out.shape
    assert bool(jnp.all(jnp.isfinite(out.astype(jnp.float32))))
    print("KERNEL_OK")
</pallas_src>

<mosaic_0001>
module attributes {stable_mosaic.version = 11 : i64} {
  func.func @squeeze_expand1x1_kernel(%arg0: i32, %arg1: i32, %arg2: memref<1x64x128xf32, #tpu.memory_space<vmem>>, %arg3: memref<16x64xbf16, #tpu.memory_space<vmem>>, %arg4: memref<16x1xf32, #tpu.memory_space<vmem>>, %arg5: memref<16x1xf32, #tpu.memory_space<vmem>>, %arg6: memref<64x16xbf16, #tpu.memory_space<vmem>>, %arg7: memref<64x1xf32, #tpu.memory_space<vmem>>, %arg8: memref<64x1xf32, #tpu.memory_space<vmem>>, %arg9: memref<1x16x128xbf16, #tpu.memory_space<vmem>>, %arg10: memref<1x64x128xbf16, #tpu.memory_space<vmem>>) attributes {dimension_semantics = [#tpu.dimension_semantics<parallel>, #tpu.dimension_semantics<parallel>], iteration_bounds = array<i64: 2, 2>, scalar_prefetch = 0 : i64, scratch_operands = 0 : i64, tpu.core_type = #tpu.core_type<tc>, window_params = [{transform_indices = @transform_0, window_bounds = array<i64: 1, 64, 128>}, {pipeline_mode = #tpu.pipeline_mode<synchronous>, transform_indices = @transform_1, window_bounds = array<i64: 16, 64>}, {pipeline_mode = #tpu.pipeline_mode<synchronous>, transform_indices = @transform_2, window_bounds = array<i64: 16, 1>}, {pipeline_mode = #tpu.pipeline_mode<synchronous>, transform_indices = @transform_3, window_bounds = array<i64: 16, 1>}, {pipeline_mode = #tpu.pipeline_mode<synchronous>, transform_indices = @transform_4, window_bounds = array<i64: 64, 16>}, {pipeline_mode = #tpu.pipeline_mode<synchronous>, transform_indices = @transform_5, window_bounds = array<i64: 64, 1>}, {pipeline_mode = #tpu.pipeline_mode<synchronous>, transform_indices = @transform_6, window_bounds = array<i64: 64, 1>}, {transform_indices = @transform_7, window_bounds = array<i64: 1, 16, 128>}, {transform_indices = @transform_8, window_bounds = array<i64: 1, 64, 128>}]} {
    %c0 = arith.constant 0 : index
    %c0_0 = arith.constant 0 : index
    %c0_1 = arith.constant 0 : index
    %0 = vector.load %arg2[%c0, %c0_0, %c0_1] : memref<1x64x128xf32, #tpu.memory_space<vmem>>, vector<1x64x128xf32>
    %1 = vector.shape_cast %0 : vector<1x64x128xf32> to vector<64x128xf32>
    %2 = arith.truncf %1 : vector<64x128xf32> to vector<64x128xbf16>
    %c0_2 = arith.constant 0 : index
    %c0_3 = arith.constant 0 : index
    %3 = vector.load %arg3[%c0_2, %c0_3] : memref<16x64xbf16, #tpu.memory_space<vmem>>, vector<16x64xbf16>
    %cst = arith.constant dense<0.000000e+00> : vector<16x128xf32>
    %4 = tpu.matmul %3, %2, %cst {dimension_numbers = #tpu.dot_dimension_numbers<[1], [0], [0], [1], [0, 0, 1, 1], [], []>} : vector<16x64xbf16>, vector<64x128xbf16>, vector<16x128xf32> -> vector<16x128xf32>
    %c0_4 = arith.constant 0 : index
    %c0_5 = arith.constant 0 : index
    %5 = vector.load %arg4[%c0_4, %c0_5] : memref<16x1xf32, #tpu.memory_space<vmem>>, vector<16x1xf32>
    %6 = vector.broadcast %5 : vector<16x1xf32> to vector<16x128xf32>
    %7 = arith.mulf %4, %6 : vector<16x128xf32>
    %c0_6 = arith.constant 0 : index
    %c0_7 = arith.constant 0 : index
    %8 = vector.load %arg5[%c0_6, %c0_7] : memref<16x1xf32, #tpu.memory_space<vmem>>, vector<16x1xf32>
    %9 = vector.broadcast %8 : vector<16x1xf32> to vector<16x128xf32>
    %10 = arith.addf %7, %9 : vector<16x128xf32>
    %cst_8 = arith.constant 0.000000e+00 : f32
    %11 = vector.broadcast %cst_8 : f32 to vector<16x128xf32>
    %12 = arith.maximumf %10, %11 : vector<16x128xf32>
    %13 = arith.truncf %12 : vector<16x128xf32> to vector<16x128xbf16>
    %c0_9 = arith.constant 0 : index
    %c0_10 = arith.constant 0 : index
    %c0_11 = arith.constant 0 : index
    %14 = vector.load %arg9[%c0_9, %c0_10, %c0_11] : memref<1x16x128xbf16, #tpu.memory_space<vmem>>, vector<1x16x128xbf16>
    %15 = vector.shape_cast %14 : vector<1x16x128xbf16> to vector<16x128xbf16>
    %16 = vector.shape_cast %13 : vector<16x128xbf16> to vector<1x16x128xbf16>
    tpu.vector_store %arg9[%c0_9, %c0_10, %c0_11], %16 {strides = array<i32>} : memref<1x16x128xbf16, #tpu.memory_space<vmem>>, vector<1x16x128xbf16>,
    %c0_12 = arith.constant 0 : index
    %c0_13 = arith.constant 0 : index
    %17 = vector.load %arg6[%c0_12, %c0_13] : memref<64x16xbf16, #tpu.memory_space<vmem>>, vector<64x16xbf16>
    %18 = arith.truncf %12 : vector<16x128xf32> to vector<16x128xbf16>
    %cst_14 = arith.constant dense<0.000000e+00> : vector<64x128xf32>
    %19 = tpu.matmul %17, %18, %cst_14 {dimension_numbers = #tpu.dot_dimension_numbers<[1], [0], [0], [1], [0, 0, 1, 1], [], []>} : vector<64x16xbf16>, vector<16x128xbf16>, vector<64x128xf32> -> vector<64x128xf32>
    %c0_15 = arith.constant 0 : index
    %c0_16 = arith.constant 0 : index
    %20 = vector.load %arg7[%c0_15, %c0_16] : memref<64x1xf32, #tpu.memory_space<vmem>>, vector<64x1xf32>
    %21 = vector.broadcast %20 : vector<64x1xf32> to vector<64x128xf32>
    %22 = arith.mulf %19, %21 : vector<64x128xf32>
    %c0_17 = arith.constant 0 : index
    %c0_18 = arith.constant 0 : index
    %23 = vector.load %arg8[%c0_17, %c0_18] : memref<64x1xf32, #tpu.memory_space<vmem>>, vector<64x1xf32>
    %24 = vector.broadcast %23 : vector<64x1xf32> to vector<64x128xf32>
    %25 = arith.addf %22, %24 : vector<64x128xf32>
    %cst_19 = arith.constant 0.000000e+00 : f32
    %26 = vector.broadcast %cst_19 : f32 to vector<64x128xf32>
    %27 = arith.maximumf %25, %26 : vector<64x128xf32>
    %28 = arith.truncf %27 : vector<64x128xf32> to vector<64x128xbf16>
    %c0_20 = arith.constant 0 : index
    %c0_21 = arith.constant 0 : index
    %c0_22 = arith.constant 0 : index
    %29 = vector.load %arg10[%c0_20, %c0_21, %c0_22] : memref<1x64x128xbf16, #tpu.memory_space<vmem>>, vector<1x64x128xbf16>
    %30 = vector.shape_cast %29 : vector<1x64x128xbf16> to vector<64x128xbf16>
    %31 = vector.shape_cast %28 : vector<64x128xbf16> to vector<1x64x128xbf16>
    tpu.vector_store %arg10[%c0_20, %c0_21, %c0_22], %31 {strides = array<i32>} : memref<1x64x128xbf16, #tpu.memory_space<vmem>>, vector<1x64x128xbf16>,
    return
  }
  func.func @transform_0(%arg0: i32, %arg1: i32) -> (i32, i32, i32) {
    %c0_i32 = arith.constant 0 : i32
    %c0_i32_0 = arith.constant 0 : i32
    return %arg0, %c0_i32, %arg1 : i32, i32, i32
  }
  func.func @transform_1(%arg0: i32, %arg1: i32) -> (i32, i32) {
    %c0_i32 = arith.constant 0 : i32
    %c0_i32_0 = arith.constant 0 : i32
    %c0_i32_1 = arith.constant 0 : i32
    return %c0_i32, %c0_i32_0 : i32, i32
  }
  func.func @transform_2(%arg0: i32, %arg1: i32) -> (i32, i32) {
    %c0_i32 = arith.constant 0 : i32
    %c0_i32_0 = arith.constant 0 : i32
    %c0_i32_1 = arith.constant 0 : i32
    return %c0_i32, %c0_i32_0 : i32, i32
  }
  func.func @transform_3(%arg0: i32, %arg1: i32) -> (i32, i32) {
    %c0_i32 = arith.constant 0 : i32
    %c0_i32_0 = arith.constant 0 : i32
    %c0_i32_1 = arith.constant 0 : i32
    return %c0_i32, %c0_i32_0 : i32, i32
  }
  func.func @transform_4(%arg0: i32, %arg1: i32) -> (i32, i32) {
    %c0_i32 = arith.constant 0 : i32
    %c0_i32_0 = arith.constant 0 : i32
    %c0_i32_1 = arith.constant 0 : i32
    return %c0_i32, %c0_i32_0 : i32, i32
  }
  func.func @transform_5(%arg0: i32, %arg1: i32) -> (i32, i32) {
    %c0_i32 = arith.constant 0 : i32
    %c0_i32_0 = arith.constant 0 : i32
    %c0_i32_1 = arith.constant 0 : i32
    return %c0_i32, %c0_i32_0 : i32, i32
  }
  func.func @transform_6(%arg0: i32, %arg1: i32) -> (i32, i32) {
    %c0_i32 = arith.constant 0 : i32
    %c0_i32_0 = arith.constant 0 : i32
    %c0_i32_1 = arith.constant 0 : i32
    return %c0_i32, %c0_i32_0 : i32, i32
  }
  func.func @transform_7(%arg0: i32, %arg1: i32) -> (i32, i32, i32) {
    %c0_i32 = arith.constant 0 : i32
    %c0_i32_0 = arith.constant 0 : i32
    return %arg0, %c0_i32, %arg1 : i32, i32, i32
  }
  func.func @transform_8(%arg0: i32, %arg1: i32) -> (i32, i32, i32) {
    %c0_i32 = arith.constant 0 : i32
    %c0_i32_0 = arith.constant 0 : i32
    return %arg0, %c0_i32, %arg1 : i32, i32, i32
  }
}

module attributes {stable_mosaic.version = 11 : i64} {
  func.func @range_expand3x3_kernel(%arg0: i32, %arg1: i32, %arg2: memref<1x144x128xbf16, #tpu.memory_space<vmem>>, %arg3: memref<1x9x128xf32, #tpu.memory_space<vmem>>, %arg4: memref<1x64x128xbf16, #tpu.memory_space<vmem>>, %arg5: memref<64x144xbf16, #tpu.memory_space<vmem>>, %arg6: memref<64x1xf32, #tpu.memory_space<vmem>>, %arg7: memref<64x1xf32, #tpu.memory_space<vmem>>, %arg8: memref<64x1xf32, #tpu.memory_space<vmem>>, %arg9: memref<64x1xf32, #tpu.memory_space<vmem>>, %arg10: memref<1x128x128xbf16, #tpu.memory_space<vmem>>) attributes {dimension_semantics = [#tpu.dimension_semantics<parallel>, #tpu.dimension_semantics<parallel>], iteration_bounds = array<i64: 2, 2>, scalar_prefetch = 0 : i64, scratch_operands = 0 : i64, tpu.core_type = #tpu.core_type<tc>, window_params = [{transform_indices = @transform_0, window_bounds = array<i64: 1, 144, 128>}, {transform_indices = @transform_1, window_bounds = array<i64: 1, 9, 128>}, {transform_indices = @transform_2, window_bounds = array<i64: 1, 64, 128>}, {pipeline_mode = #tpu.pipeline_mode<synchronous>, transform_indices = @transform_3, window_bounds = array<i64: 64, 144>}, {pipeline_mode = #tpu.pipeline_mode<synchronous>, transform_indices = @transform_4, window_bounds = array<i64: 64, 1>}, {pipeline_mode = #tpu.pipeline_mode<synchronous>, transform_indices = @transform_5, window_bounds = array<i64: 64, 1>}, {pipeline_mode = #tpu.pipeline_mode<synchronous>, transform_indices = @transform_6, window_bounds = array<i64: 64, 1>}, {pipeline_mode = #tpu.pipeline_mode<synchronous>, transform_indices = @transform_7, window_bounds = array<i64: 64, 1>}, {transform_indices = @transform_8, window_bounds = array<i64: 1, 128, 128>}]} {
    %c0 = arith.constant 0 : index
    %c0_0 = arith.constant 0 : index
    %c0_1 = arith.constant 0 : index
    %0 = vector.load %arg2[%c0, %c0_0, %c0_1] : memref<1x144x128xbf16, #tpu.memory_space<vmem>>, vector<1x144x128xbf16>
    %1 = vector.shape_cast %0 : vector<1x144x128xbf16> to vector<144x128xbf16>
    %c0_2 = arith.constant 0 : index
    %c0_3 = arith.constant 0 : index
    %c0_4 = arith.constant 0 : index
    %2 = vector.load %arg3[%c0_2, %c0_3, %c0_4] : memref<1x9x128xf32, #tpu.memory_space<vmem>>, vector<1x9x128xf32>
    %3 = vector.shape_cast %2 : vector<1x9x128xf32> to vector<9x128xf32>
    %c0_5 = arith.constant 0 : index
    %c0_6 = arith.constant 0 : index
    %4 = vector.load %arg5[%c0_5, %c0_6] : memref<64x144xbf16, #tpu.memory_space<vmem>>, vector<64x144xbf16>
    %cst = arith.constant dense<0.000000e+00> : vector<64x128xf32>
    %5 = tpu.matmul %4, %1, %cst {dimension_numbers = #tpu.dot_dimension_numbers<[1], [0], [0], [1], [0, 0, 1, 1], [], []>} : vector<64x144xbf16>, vector<144x128xbf16>, vector<64x128xf32> -> vector<64x128xf32>
    %6 = vector.extract_strided_slice %1 {offsets = [0, 0], sizes = [16, 128], strides = [1, 1]} : vector<144x128xbf16> to vector<16x128xbf16>
    %7 = arith.extf %6 : vector<16x128xbf16> to vector<16x128xf32>
    %8 = vector.extract_strided_slice %3 {offsets = [0, 0], sizes = [1, 128], strides = [1, 1]} : vector<9x128xf32> to vector<1x128xf32>
    %9 = vector.broadcast %8 : vector<1x128xf32> to vector<16x128xf32>
    %10 = arith.mulf %7, %9 : vector<16x128xf32>
    %11 = arith.truncf %10 : vector<16x128xf32> to vector<16x128xbf16>
    %12 = vector.extract_strided_slice %1 {offsets = [16, 0], sizes = [16, 128], strides = [1, 1]} : vector<144x128xbf16> to vector<16x128xbf16>
    %13 = arith.extf %12 : vector<16x128xbf16> to vector<16x128xf32>
    %14 = vector.extract_strided_slice %3 {offsets = [1, 0], sizes = [1, 128], strides = [1, 1]} : vector<9x128xf32> to vector<1x128xf32>
    %15 = vector.broadcast %14 : vector<1x128xf32> to vector<16x128xf32>
    %16 = arith.mulf %13, %15 : vector<16x128xf32>
    %17 = arith.truncf %16 : vector<16x128xf32> to vector<16x128xbf16>
    %18 = vector.extract_strided_slice %1 {offsets = [32, 0], sizes = [16, 128], strides = [1, 1]} : vector<144x128xbf16> to vector<16x128xbf16>
    %19 = arith.extf %18 : vector<16x128xbf16> to vector<16x128xf32>
    %20 = vector.extract_strided_slice %3 {offsets = [2, 0], sizes = [1, 128], strides = [1, 1]} : vector<9x128xf32> to vector<1x128xf32>
    %21 = vector.broadcast %20 : vector<1x128xf32> to vector<16x128xf32>
    %22 = arith.mulf %19, %21 : vector<16x128xf32>
    %23 = arith.truncf %22 : vector<16x128xf32> to vector<16x128xbf16>
    %24 = vector.extract_strided_slice %1 {offsets = [48, 0], sizes = [16, 128], strides = [1, 1]} : vector<144x128xbf16> to vector<16x128xbf16>
    %25 = arith.extf %24 : vector<16x128xbf16> to vector<16x128xf32>
    %26 = vector.extract_strided_slice %3 {offsets = [3, 0], sizes = [1, 128], strides = [1, 1]} : vector<9x128xf32> to vector<1x128xf32>
    %27 = vector.broadcast %26 : vector<1x128xf32> to vector<16x128xf32>
    %28 = arith.mulf %25, %27 : vector<16x128xf32>
    %29 = arith.truncf %28 : vector<16x128xf32> to vector<16x128xbf16>
    %30 = vector.extract_strided_slice %1 {offsets = [64, 0], sizes = [16, 128], strides = [1, 1]} : vector<144x128xbf16> to vector<16x128xbf16>
    %31 = arith.extf %30 : vector<16x128xbf16> to vector<16x128xf32>
    %32 = vector.extract_strided_slice %3 {offsets = [4, 0], sizes = [1, 128], strides = [1, 1]} : vector<9x128xf32> to vector<1x128xf32>
    %33 = vector.broadcast %32 : vector<1x128xf32> to vector<16x128xf32>
    %34 = arith.mulf %31, %33 : vector<16x128xf32>
    %35 = arith.truncf %34 : vector<16x128xf32> to vector<16x128xbf16>
    %36 = vector.extract_strided_slice %1 {offsets = [80, 0], sizes = [16, 128], strides = [1, 1]} : vector<144x128xbf16> to vector<16x128xbf16>
    %37 = arith.extf %36 : vector<16x128xbf16> to vector<16x128xf32>
    %38 = vector.extract_strided_slice %3 {offsets = [5, 0], sizes = [1, 128], strides = [1, 1]} : vector<9x128xf32> to vector<1x128xf32>
    %39 = vector.broadcast %38 : vector<1x128xf32> to vector<16x128xf32>
    %40 = arith.mulf %37, %39 : vector<16x128xf32>
    %41 = arith.truncf %40 : vector<16x128xf32> to vector<16x128xbf16>
    %42 = vector.extract_strided_slice %1 {offsets = [96, 0], sizes = [16, 128], strides = [1, 1]} : vector<144x128xbf16> to vector<16x128xbf16>
    %43 = arith.extf %42 : vector<16x128xbf16> to vector<16x128xf32>
    %44 = vector.extract_strided_slice %3 {offsets = [6, 0], sizes = [1, 128], strides = [1, 1]} : vector<9x128xf32> to vector<1x128xf32>
    %45 = vector.broadcast %44 : vector<1x128xf32> to vector<16x128xf32>
    %46 = arith.mulf %43, %45 : vector<16x128xf32>
    %47 = arith.truncf %46 : vector<16x128xf32> to vector<16x128xbf16>
    %48 = vector.extract_strided_slice %1 {offsets = [112, 0], sizes = [16, 128], strides = [1, 1]} : vector<144x128xbf16> to vector<16x128xbf16>
    %49 = arith.extf %48 : vector<16x128xbf16> to vector<16x128xf32>
    %50 = vector.extract_strided_slice %3 {offsets = [7, 0], sizes = [1, 128], strides = [1, 1]} : vector<9x128xf32> to vector<1x128xf32>
    %51 = vector.broadcast %50 : vector<1x128xf32> to vector<16x128xf32>
    %52 = arith.mulf %49, %51 : vector<16x128xf32>
    %53 = arith.truncf %52 : vector<16x128xf32> to vector<16x128xbf16>
    %54 = vector.extract_strided_slice %1 {offsets = [128, 0], sizes = [16, 128], strides = [1, 1]} : vector<144x128xbf16> to vector<16x128xbf16>
    %55 = arith.extf %54 : vector<16x128xbf16> to vector<16x128xf32>
    %56 = vector.extract_strided_slice %3 {offsets = [8, 0], sizes = [1, 128], strides = [1, 1]} : vector<9x128xf32> to vector<1x128xf32>
    %57 = vector.broadcast %56 : vector<1x128xf32> to vector<16x128xf32>
    %58 = arith.mulf %55, %57 : vector<16x128xf32>
    %59 = arith.truncf %58 : vector<16x128xf32> to vector<16x128xbf16>
    %60 = tpu.concatenate %11, %17, %23, %29, %35, %41, %47, %53, %59 in 0 : vector<16x128xbf16>, vector<16x128xbf16>, vector<16x128xbf16>, vector<16x128xbf16>, vector<16x128xbf16>, vector<16x128xbf16>, vector<16x128xbf16>, vector<16x128xbf16>, vector<16x128xbf16> -> vector<144x128xbf16>
    %cst_7 = arith.constant dense<0.000000e+00> : vector<64x128xf32>
    %61 = tpu.matmul %4, %60, %cst_7 {dimension_numbers = #tpu.dot_dimension_numbers<[1], [0], [0], [1], [0, 0, 1, 1], [], []>} : vector<64x144xbf16>, vector<144x128xbf16>, vector<64x128xf32> -> vector<64x128xf32>
    %c0_8 = arith.constant 0 : index
    %c0_9 = arith.constant 0 : index
    %62 = vector.load %arg6[%c0_8, %c0_9] : memref<64x1xf32, #tpu.memory_space<vmem>>, vector<64x1xf32>
    %63 = vector.broadcast %62 : vector<64x1xf32> to vector<64x128xf32>
    %64 = arith.mulf %5, %63 : vector<64x128xf32>
    %c0_10 = arith.constant 0 : index
    %c0_11 = arith.constant 0 : index
    %65 = vector.load %arg7[%c0_10, %c0_11] : memref<64x1xf32, #tpu.memory_space<vmem>>, vector<64x1xf32>
    %66 = vector.broadcast %65 : vector<64x1xf32> to vector<64x128xf32>
    %67 = arith.addf %64, %66 : vector<64x128xf32>
    %cst_12 = arith.constant 0.000000e+00 : f32
    %68 = vector.broadcast %cst_12 : f32 to vector<64x128xf32>
    %69 = arith.cmpf ogt, %67, %68 : vector<64x128xf32>
    %cst_13 = arith.constant 0.00999999977 : f32
    %70 = vector.broadcast %cst_13 : f32 to vector<64x128xf32>
    %71 = arith.mulf %70, %67 : vector<64x128xf32>
    %72 = arith.select %69, %67, %71 : vector<64x128xi1>, vector<64x128xf32>
    %c0_14 = arith.constant 0 : index
    %c0_15 = arith.constant 0 : index
    %73 = vector.load %arg6[%c0_14, %c0_15] : memref<64x1xf32, #tpu.memory_space<vmem>>, vector<64x1xf32>
    %74 = vector.broadcast %73 : vector<64x1xf32> to vector<64x128xf32>
    %75 = arith.mulf %61, %74 : vector<64x128xf32>
    %c0_16 = arith.constant 0 : index
    %c0_17 = arith.constant 0 : index
    %76 = vector.load %arg7[%c0_16, %c0_17] : memref<64x1xf32, #tpu.memory_space<vmem>>, vector<64x1xf32>
    %77 = vector.broadcast %76 : vector<64x1xf32> to vector<64x128xf32>
    %78 = arith.addf %75, %77 : vector<64x128xf32>
    %cst_18 = arith.constant 0.000000e+00 : f32
    %79 = vector.broadcast %cst_18 : f32 to vector<64x128xf32>
    %80 = arith.cmpf ogt, %78, %79 : vector<64x128xf32>
    %cst_19 = arith.constant 0.00999999977 : f32
    %81 = vector.broadcast %cst_19 : f32 to vector<64x128xf32>
    %82 = arith.mulf %81, %78 : vector<64x128xf32>
    %83 = arith.select %80, %78, %82 : vector<64x128xi1>, vector<64x128xf32>
    %84 = vector.extract_strided_slice %3 {offsets = [4, 0], sizes = [1, 128], strides = [1, 1]} : vector<9x128xf32> to vector<1x128xf32>
    %85 = vector.broadcast %84 : vector<1x128xf32> to vector<64x128xf32>
    %86 = arith.mulf %72, %85 : vector<64x128xf32>
    %87 = arith.subf %86, %83 : vector<64x128xf32>
    %88 = math.absf %87 : vector<64x128xf32>
    %89 = arith.subf %72, %88 : vector<64x128xf32>
    %c0_20 = arith.constant 0 : index
    %c0_21 = arith.constant 0 : index
    %90 = vector.load %arg8[%c0_20, %c0_21] : memref<64x1xf32, #tpu.memory_space<vmem>>, vector<64x1xf32>
    %91 = vector.broadcast %90 : vector<64x1xf32> to vector<64x128xf32>
    %92 = arith.mulf %89, %91 : vector<64x128xf32>
    %c0_22 = arith.constant 0 : index
    %c0_23 = arith.constant 0 : index
    %93 = vector.load %arg9[%c0_22, %c0_23] : memref<64x1xf32, #tpu.memory_space<vmem>>, vector<64x1xf32>
    %94 = vector.broadcast %93 : vector<64x1xf32> to vector<64x128xf32>
    %95 = arith.addf %92, %94 : vector<64x128xf32>
    %cst_24 = arith.constant 0.000000e+00 : f32
    %96 = vector.broadcast %cst_24 : f32 to vector<64x128xf32>
    %97 = arith.maximumf %95, %96 : vector<64x128xf32>
    %c0_25 = arith.constant 0 : index
    %c0_26 = arith.constant 0 : index
    %c0_27 = arith.constant 0 : index
    %98 = vector.load %arg4[%c0_25, %c0_26, %c0_27] : memref<1x64x128xbf16, #tpu.memory_space<vmem>>, vector<1x64x128xbf16>
    %99 = vector.shape_cast %98 : vector<1x64x128xbf16> to vector<64x128xbf16>
    %100 = arith.truncf %97 : vector<64x128xf32> to vector<64x128xbf16>
    %101 = tpu.concatenate %99, %100 in 0 : vector<64x128xbf16>, vector<64x128xbf16> -> vector<128x128xbf16>
    %c0_28 = arith.constant 0 : index
    %c0_29 = arith.constant 0 : index
    %c0_30 = arith.constant 0 : index
    %102 = vector.load %arg10[%c0_28, %c0_29, %c0_30] : memref<1x128x128xbf16, #tpu.memory_space<vmem>>, vector<1x128x128xbf16>
    %103 = vector.shape_cast %102 : vector<1x128x128xbf16> to vector<128x128xbf16>
    %104 = vector.shape_cast %101 : vector<128x128xbf16> to vector<1x128x128xbf16>
    tpu.vector_store %arg10[%c0_28, %c0_29, %c0_30], %104 {strides = array<i32>} : memref<1x128x128xbf16, #tpu.memory_space<vmem>>, vector<1x128x128xbf16>,
    return
  }
  func.func @transform_0(%arg0: i32, %arg1: i32) -> (i32, i32, i32) {
    %c0_i32 = arith.constant 0 : i32
    %c0_i32_0 = arith.constant 0 : i32
    return %arg0, %c0_i32, %arg1 : i32, i32, i32
  }
  func.func @transform_1(%arg0: i32, %arg1: i32) -> (i32, i32, i32) {
    %c0_i32 = arith.constant 0 : i32
    %c0_i32_0 = arith.constant 0 : i32
    return %arg0, %c0_i32, %arg1 : i32, i32, i32
  }
  func.func @transform_2(%arg0: i32, %arg1: i32) -> (i32, i32, i32) {
    %c0_i32 = arith.constant 0 : i32
    %c0_i32_0 = arith.constant 0 : i32
    return %arg0, %c0_i32, %arg1 : i32, i32, i32
  }
  func.func @transform_3(%arg0: i32, %arg1: i32) -> (i32, i32) {
    %c0_i32 = arith.constant 0 : i32
    %c0_i32_0 = arith.constant 0 : i32
    %c0_i32_1 = arith.constant 0 : i32
    return %c0_i32, %c0_i32_0 : i32, i32
  }
  func.func @transform_4(%arg0: i32, %arg1: i32) -> (i32, i32) {
    %c0_i32 = arith.constant 0 : i32
    %c0_i32_0 = arith.constant 0 : i32
    %c0_i32_1 = arith.constant 0 : i32
    return %c0_i32, %c0_i32_0 : i32, i32
  }
  func.func @transform_5(%arg0: i32, %arg1: i32) -> (i32, i32) {
    %c0_i32 = arith.constant 0 : i32
    %c0_i32_0 = arith.constant 0 : i32
    %c0_i32_1 = arith.constant 0 : i32
    return %c0_i32, %c0_i32_0 : i32, i32
  }
  func.func @transform_6(%arg0: i32, %arg1: i32) -> (i32, i32) {
    %c0_i32 = arith.constant 0 : i32
    %c0_i32_0 = arith.constant 0 : i32
    %c0_i32_1 = arith.constant 0 : i32
    return %c0_i32, %c0_i32_0 : i32, i32
  }
  func.func @transform_7(%arg0: i32, %arg1: i32) -> (i32, i32) {
    %c0_i32 = arith.constant 0 : i32
    %c0_i32_0 = arith.constant 0 : i32
    %c0_i32_1 = arith.constant 0 : i32
    return %c0_i32, %c0_i32_0 : i32, i32
  }
  func.func @transform_8(%arg0: i32, %arg1: i32) -> (i32, i32, i32) {
    %c0_i32 = arith.constant 0 : i32
    %c0_i32_0 = arith.constant 0 : i32
    return %arg0, %c0_i32, %arg1 : i32, i32, i32
  }
}

</mosaic_0001>

<llo_original>
// kernel: _lambda_.2
$region0: #{_lambda_.2}
  #allocation0 [shape = 'u32[]', space=smem, size = 0x4, offset = 0x4, fixed_abs, tag = 'smem constant byte address 0x4 - core index']
  #allocation1 [shape = 'u32[144,128]{1,0:T(1,128)}', space=vmem, size = 0x12000, scoped, tag = 'internal scratch']
  %s0 = inlined_call_operand.vmem [shape: f32[2,64,256], index: 0, kind: input, shape index: {}]
  %s1 = inlined_call_operand.vmem [shape: bf16[16,64], index: 1, kind: input, shape index: {}]
  %s2 = inlined_call_operand.vmem [shape: f32[16,1], index: 2, kind: input, shape index: {}]
  %s3 = inlined_call_operand.vmem [shape: f32[16,1], index: 3, kind: input, shape index: {}]
  %s4 = inlined_call_operand.vmem [shape: bf16[64,16], index: 4, kind: input, shape index: {}]
  %s5 = inlined_call_operand.vmem [shape: f32[64,1], index: 5, kind: input, shape index: {}]
  %s6 = inlined_call_operand.vmem [shape: f32[64,1], index: 6, kind: input, shape index: {}]
  %s7 = inlined_call_operand.vmem [shape: bf16[2,16,256], index: 7, kind: output, shape index: {0}]
  %s8 = inlined_call_operand.vmem [shape: bf16[2,64,256], index: 8, kind: output, shape index: {1}]
  %9 = xla_tuple %s7, %s8
  %s10 = sld [smem:[#allocation0]]
  $region181: #{_lambda_.2} parent=0
    _
  %s12 = ssub.s32 1, %s10
  %s13 = scalar_select 0, %s12, %s10
  $region1: #{_lambda_.2} parent=0
    #allocation2 [shape = 'u8[65536]{0}', space=vmem, size = 0x10000, scoped, tag = 'input window, operand 0']
    #allocation3 [shape = 'u8[8192]{0}', space=vmem, size = 0x2000, scoped, tag = 'output window, operand 0']
    #allocation4 [shape = 'u8[32768]{0}', space=vmem, size = 0x8000, scoped, tag = 'output window, operand 1']
    loop: start=0, step=1, limit=6
    $region2: #{_lambda_.2} parent=1 // loop_pre_header
      _
    $region3: #{_lambda_.2} parent=1 // loop_header
      %s15 = sphi 0, %s19
      %p16 = scmp.ge.s32.totalorder %s15, 6
      %s22 = sphi 0, %s34
      %s23 = sphi 0, %s30
      %s24 = sphi 0, %s22
      %s25 = sphi 0, %s23
      %s26 = sphi 0, %s24
      %s27 = sphi 0, %s25
      %s39 = sphi 0, %s41
      %s42 = sphi 0, %s39
      %s43 = sphi 0, %s42
      %s59 = sphi 0, %s43
      %s63 = sphi 0, %s63
      %s65 = sphi 0, %s63
      %s66 = sphi 0, %s65
      %s80 = sphi 0, %s66
      %s84 = sphi 0, %s84
      %s86 = sphi 0, %s84
      %s87 = sphi 0, %s86
      %s101 = sphi 0, %s87
      %s105 = sphi 0, %s105
      %s107 = sphi 0, %s105
      %s108 = sphi 0, %s107
      %s122 = sphi 0, %s108
      %s126 = sphi 0, %s126
      %s128 = sphi 0, %s126
      %s129 = sphi 0, %s128
      %s143 = sphi 0, %s129
      %s147 = sphi 0, %s147
      %s149 = sphi 0, %s147
      %s150 = sphi 0, %s149
      %s164 = sphi 0, %s150
      %s168 = sphi 0, %s168
      %s170 = sphi 0, %s168
      %s171 = sphi 0, %s170
      %s185 = sphi 0, %s171
      %s193 = sphi 0, %s195
      %s196 = sphi 0, %s193
      %s197 = sphi 0, %s196
      %s213 = sphi 0, %s197
      %s221 = sphi 0, %s223
      %s224 = sphi 0, %s221
      %s225 = sphi 0, %s224
      %s241 = sphi 0, %s225
    $region4: #{_lambda_.2} parent=1 // loop_header_branch
      %18 = sbr.rel (%p16) target = $region8
    $region5: #{_lambda_.2} parent=1 // loop_body
      %s20 = ssub.s32 %s15, 1
      %s21 = ssub.s32 %s15, 2
      %s28 = sadd.s32 1, %s23
      %p29 = scmp.ge.s32.totalorder %s28, 2
      %s30 = scalar_select %p29, 0, %s28
      %s31 = sadd.s32 1, %s22
      %s32 = scalar_select %p29, %s31, %s22
      %p33 = scmp.ge.s32.totalorder %s32, 2
      %s34 = scalar_select %p33, 0, %s32
      %s35 = ssub.s32 %s22, %s34
      %s36 = ssub.s32 %s23, %s30
      %s37 = sor.u32 %s35, %s36
      %p38 = scmp.eq.s32.totalorder %s37, 0
      %s40 = sadd.s32 %s39, 1
      %s41 = scalar_select %p38, %s39, %s40
      %p44 = pneg %p38
      %p45 = scmp.eq.s32.totalorder %s15, 3
      %p46 = por %p44, %p45
      %p47 = scmp.ne.s32.totalorder %s39, %s42
      %p48 = scmp.eq.s32.totalorder %s15, 0
      %p49 = por %p47, %p48
      %p50 = scmp.ne.s32.totalorder %s39, %s42
      %p51 = scmp.eq.s32.totalorder %s20, 3
      %p52 = por %p50, %p51
      %p53 = scmp.ne.s32.totalorder %s42, %s43
      %p54 = scmp.eq.s32.totalorder %s20, 0
      %p55 = por %p53, %p54
      %p56 = scmp.ne.s32.totalorder %s42, %s43
      %p57 = scmp.eq.s32.totalorder %s21, 3
      %p58 = por %p56, %p57
      %p60 = scmp.ne.s32.totalorder %s43, %s59
      %p61 = scmp.eq.s32.totalorder %s21, 0
      %p62 = por %p60, %p61
      %s64 = sadd.s32 %s63, 1
      %p67 = scmp.eq.s32.totalorder %s15, 3
      %p68 = scmp.ne.s32.totalorder %s63, %s65
      %p69 = scmp.eq.s32.totalorder %s15, 0
      %p70 = por %p68, %p69
      %p71 = scmp.ne.s32.totalorder %s63, %s65
      %p72 = scmp.eq.s32.totalorder %s20, 3
      %p73 = por %p71, %p72
      %p74 = scmp.ne.s32.totalorder %s65, %s66
      %p75 = scmp.eq.s32.totalorder %s20, 0
      %p76 = por %p74, %p75
      %p77 = scmp.ne.s32.totalorder %s65, %s66
      %p78 = scmp.eq.s32.totalorder %s21, 3
      %p79 = por %p77, %p78
      %p81 = scmp.ne.s32.totalorder %s66, %s80
      %p82 = scmp.eq.s32.totalorder %s21, 0
      %p83 = por %p81, %p82
      %s85 = sadd.s32 %s84, 1
      %p88 = scmp.eq.s32.totalorder %s15, 3
      %p89 = scmp.ne.s32.totalorder %s84, %s86
      %p90 = scmp.eq.s32.totalorder %s15, 0
      %p91 = por %p89, %p90
      %p92 = scmp.ne.s32.totalorder %s84, %s86
      %p93 = scmp.eq.s32.totalorder %s20, 3
      %p94 = por %p92, %p93
      %p95 = scmp.ne.s32.totalorder %s86, %s87
      %p96 = scmp.eq.s32.totalorder %s20, 0
      %p97 = por %p95, %p96
      %p98 = scmp.ne.s32.totalorder %s86, %s87
      %p99 = scmp.eq.s32.totalorder %s21, 3
      %p100 = por %p98, %p99
      %p102 = scmp.ne.s32.totalorder %s87, %s101
      %p103 = scmp.eq.s32.totalorder %s21, 0
      %p104 = por %p102, %p103
      %s106 = sadd.s32 %s105, 1
      %p109 = scmp.eq.s32.totalorder %s15, 3
      %p110 = scmp.ne.s32.totalorder %s105, %s107
      %p111 = scmp.eq.s32.totalorder %s15, 0
      %p112 = por %p110, %p111
      %p113 = scmp.ne.s32.totalorder %s105, %s107
      %p114 = scmp.eq.s32.totalorder %s20, 3
      %p115 = por %p113, %p114
      %p116 = scmp.ne.s32.totalorder %s107, %s108
      %p117 = scmp.eq.s32.totalorder %s20, 0
      %p118 = por %p116, %p117
      %p119 = scmp.ne.s32.totalorder %s107, %s108
      %p120 = scmp.eq.s32.totalorder %s21, 3
      %p121 = por %p119, %p120
      %p123 = scmp.ne.s32.totalorder %s108, %s122
      %p124 = scmp.eq.s32.totalorder %s21, 0
      %p125 = por %p123, %p124
      %s127 = sadd.s32 %s126, 1
      %p130 = scmp.eq.s32.totalorder %s15, 3
      %p131 = scmp.ne.s32.totalorder %s126, %s128
      %p132 = scmp.eq.s32.totalorder %s15, 0
      %p133 = por %p131, %p132
      %p134 = scmp.ne.s32.totalorder %s126, %s128
      %p135 = scmp.eq.s32.totalorder %s20, 3
      %p136 = por %p134, %p135
      %p137 = scmp.ne.s32.totalorder %s128, %s129
      %p138 = scmp.eq.s32.totalorder %s20, 0
      %p139 = por %p137, %p138
      %p140 = scmp.ne.s32.totalorder %s128, %s129
      %p141 = scmp.eq.s32.totalorder %s21, 3
      %p142 = por %p140, %p141
      %p144 = scmp.ne.s32.totalorder %s129, %s143
      %p145 = scmp.eq.s32.totalorder %s21, 0
      %p146 = por %p144, %p145
      %s148 = sadd.s32 %s147, 1
      %p151 = scmp.eq.s32.totalorder %s15, 3
      %p152 = scmp.ne.s32.totalorder %s147, %s149
      %p153 = scmp.eq.s32.totalorder %s15, 0
      %p154 = por %p152, %p153
      %p155 = scmp.ne.s32.totalorder %s147, %s149
      %p156 = scmp.eq.s32.totalorder %s20, 3
      %p157 = por %p155, %p156
      %p158 = scmp.ne.s32.totalorder %s149, %s150
      %p159 = scmp.eq.s32.totalorder %s20, 0
      %p160 = por %p158, %p159
      %p161 = scmp.ne.s32.totalorder %s149, %s150
      %p162 = scmp.eq.s32.totalorder %s21, 3
      %p163 = por %p161, %p162
      %p165 = scmp.ne.s32.totalorder %s150, %s164
      %p166 = scmp.eq.s32.totalorder %s21, 0
      %p167 = por %p165, %p166
      %s169 = sadd.s32 %s168, 1
      %p172 = scmp.eq.s32.totalorder %s15, 3
      %p173 = scmp.ne.s32.totalorder %s168, %s170
      %p174 = scmp.eq.s32.totalorder %s15, 0
      %p175 = por %p173, %p174
      %p176 = scmp.ne.s32.totalorder %s168, %s170
      %p177 = scmp.eq.s32.totalorder %s20, 3
      %p178 = por %p176, %p177
      %p179 = scmp.ne.s32.totalorder %s170, %s171
      %p180 = scmp.eq.s32.totalorder %s20, 0
      %p181 = por %p179, %p180
      %p182 = scmp.ne.s32.totalorder %s170, %s171
      %p183 = scmp.eq.s32.totalorder %s21, 3
      %p184 = por %p182, %p183
      %p186 = scmp.ne.s32.totalorder %s171, %s185
      %p187 = scmp.eq.s32.totalorder %s21, 0
      %p188 = por %p186, %p187
      %s189 = ssub.s32 %s22, %s34
      %s190 = ssub.s32 %s23, %s30
      %s191 = sor.u32 %s189, %s190
      %p192 = scmp.eq.s32.totalorder %s191, 0
      %s194 = sadd.s32 %s193, 1
      %s195 = scalar_select %p192, %s193, %s194
      %p198 = pneg %p192
      %p199 = scmp.eq.s32.totalorder %s15, 3
      %p200 = por %p198, %p199
      %p201 = scmp.ne.s32.totalorder %s193, %s196
      %p202 = scmp.eq.s32.totalorder %s15, 0
      %p203 = por %p201, %p202
      %p204 = scmp.ne.s32.totalorder %s193, %s196
      %p205 = scmp.eq.s32.totalorder %s20, 3
      %p206 = por %p204, %p205
      %p207 = scmp.ne.s32.totalorder %s196, %s197
      %p208 = scmp.eq.s32.totalorder %s20, 0
      %p209 = por %p207, %p208
      %p210 = scmp.ne.s32.totalorder %s196, %s197
      %p211 = scmp.eq.s32.totalorder %s21, 3
      %p212 = por %p210, %p211
      %p214 = scmp.ne.s32.totalorder %s197, %s213
      %p215 = scmp.eq.s32.totalorder %s21, 0
      %p216 = por %p214, %p215
      %s217 = ssub.s32 %s22, %s34
      %s218 = ssub.s32 %s23, %s30
      %s219 = sor.u32 %s217, %s218
      %p220 = scmp.eq.s32.totalorder %s219, 0
      %s222 = sadd.s32 %s221, 1
      %s223 = scalar_select %p220, %s221, %s222
      %p226 = pneg %p220
      %p227 = scmp.eq.s32.totalorder %s15, 3
      %p228 = por %p226, %p227
      %p229 = scmp.ne.s32.totalorder %s221, %s224
      %p230 = scmp.eq.s32.totalorder %s15, 0
      %p231 = por %p229, %p230
      %p232 = scmp.ne.s32.totalorder %s221, %s224
      %p233 = scmp.eq.s32.totalorder %s20, 3
      %p234 = por %p232, %p233
      %p235 = scmp.ne.s32.totalorder %s224, %s225
      %p236 = scmp.eq.s32.totalorder %s20, 0
      %p237 = por %p235, %p236
      %p238 = scmp.ne.s32.totalorder %s224, %s225
      %p239 = scmp.eq.s32.totalorder %s21, 3
      %p240 = por %p238, %p239
      %p242 = scmp.ne.s32.totalorder %s225, %s241
      %p243 = scmp.eq.s32.totalorder %s21, 0
      %p244 = por %p242, %p243
      %p245 = scmp.le.s32.totalorder 1, %s15
      %p246 = scmp.lt.s32.totalorder %s15, 5
      %p247 = pnand %p245, %p246
      %p248 = pneg %p247
      // Predicated region
      $region9: #{_lambda_.2} parent=5 // pred_check
        _
      $region10: #{_lambda_.2} parent=5 // pred_check_branch
        %250 = sbr.rel (%p247) target = $region12
      $region11: #{_lambda_.2} parent=5 // pred_region
        %s251 = ssub.s32 %s15, 1
        // Predicated region
        $region13: #{_lambda_.2} parent=11 // pred_check
          %p252 = pneg %p76
        $region14: #{_lambda_.2} parent=11 // pred_check_branch
          %254 = sbr.rel (%p252) target = $region16
        $region15: #{_lambda_.2} parent=11 // pred_region
          _
        $region16: #{_lambda_.2} parent=11 // pred_fallthru
          _
        // Predicated region
        $region17: #{_lambda_.2} parent=11 // pred_check
          %p255 = pneg %p97
        $region18: #{_lambda_.2} parent=11 // pred_check_branch
          %257 = sbr.rel (%p255) target = $region20
        $region19: #{_lambda_.2} parent=11 // pred_region
          _
        $region20: #{_lambda_.2} parent=11 // pred_fallthru
          _
        // Predicated region
        $region21: #{_lambda_.2} parent=11 // pred_check
          %p258 = pneg %p118
        $region22: #{_lambda_.2} parent=11 // pred_check_branch
          %260 = sbr.rel (%p258) target = $region24
        $region23: #{_lambda_.2} parent=11 // pred_region
          _
        $region24: #{_lambda_.2} parent=11 // pred_fallthru
          _
        // Predicated region
        $region25: #{_lambda_.2} parent=11 // pred_check
          %p261 = pneg %p139
        $region26: #{_lambda_.2} parent=11 // pred_check_branch
          %263 = sbr.rel (%p261) target = $region28
        $region27: #{_lambda_.2} parent=11 // pred_region
          _
        $region28: #{_lambda_.2} parent=11 // pred_fallthru
          _
        // Predicated region
        $region29: #{_lambda_.2} parent=11 // pred_check
          %p264 = pneg %p160
        $region30: #{_lambda_.2} parent=11 // pred_check_branch
          %266 = sbr.rel (%p264) target = $region32
        $region31: #{_lambda_.2} parent=11 // pred_region
          _
        $region32: #{_lambda_.2} parent=11 // pred_fallthru
          _
        // Predicated region
        $region33: #{_lambda_.2} parent=11 // pred_check
          %p267 = pneg %p181
        $region34: #{_lambda_.2} parent=11 // pred_check_branch
          %269 = sbr.rel (%p267) target = $region36
        $region35: #{_lambda_.2} parent=11 // pred_region
          _
        $region36: #{_lambda_.2} parent=11 // pred_fallthru
          _
      $region12: #{_lambda_.2} parent=5 // pred_fallthru
        _
      %p270 = scmp.lt.s32.totalorder %s15, 4
      // Predicated region
      $region37: #{_lambda_.2} parent=5 // pred_check
        %p271 = pneg %p270
      $region38: #{_lambda_.2} parent=5 // pred_check_branch
        %273 = sbr.rel (%p271) target = $region40
      $region39: #{_lambda_.2} parent=5 // pred_region
        // Predicated region
        $region41: #{_lambda_.2} parent=39 // pred_check
          %p274 = pneg %p49
        $region42: #{_lambda_.2} parent=39 // pred_check_branch
          %276 = sbr.rel (%p274) target = $region44
        $region43: #{_lambda_.2} parent=39 // pred_region
          %s277 = sand.u32 %s39, 1
          %s278 = sand.u32 %s39, 1
          %s279 = smul.addr %s278, 64
          %s280 = scalar_lea.vmem [#allocation2], %s279
          %s281 = smul.addr %s22, 16
          %s282 = sadd.s32 %s23, %s281
          %s283 = smul.addr %s282, 8
          %s284 = scalar_lea.vmem %s0, %s283
          // Predicated region
          $region45: #{_lambda_.2} parent=43 // pred_check
            _
          $region46: #{_lambda_.2} parent=43 // pred_check_branch
            %286 = sbr.rel (0) target = $region48
          $region47: #{_lambda_.2} parent=43 // pred_region
            // Predicated region
            $region49: #{_lambda_.2} parent=47 // pred_check
              _
            $region50: #{_lambda_.2} parent=47 // pred_check_branch
              %288 = sbr.rel (0) target = $region52
            $region51: #{_lambda_.2} parent=47 // pred_region
              // Predicated region
              $region64: #{_lambda_.2} parent=51 // pred_check
                _
              $region65: #{_lambda_.2} parent=51 // pred_check_branch
                %317 = sbr.rel (0) target = $region67
              $region66: #{_lambda_.2} parent=51 // pred_region
                loop: start=0, step=1, limit=1
                $region68: #{_lambda_.2} parent=66 // loop_pre_header
                  _
                $region69: #{_lambda_.2} parent=66 // loop_header
                  %s319 = sphi 0, %s323
                  %p320 = scmp.ge.s32.totalorder %s319, 1
                  %s324 = sphi %s284, %s284
                  %s325 = sphi %s280, %s280
                $region70: #{_lambda_.2} parent=66 // loop_header_branch
                  %322 = sbr.rel (%p320) target = $region74
                $region71: #{_lambda_.2} parent=66 // loop_body
                  %v326 = vld [vmem:[%s324] sm:$0xff]
                  %327 = vst [vmem:[%s325] sm:$0xff] %v326
                  %v328 = vld [vmem:[%s324 + $0x10] sm:$0xff]
                  %329 = vst [vmem:[%s325 + $0x8] sm:$0xff] %v328
                  %v330 = vld [vmem:[%s324 + $0x20] sm:$0xff]
                  %331 = vst [vmem:[%s325 + $0x10] sm:$0xff] %v330
                  %v332 = vld [vmem:[%s324 + $0x30] sm:$0xff]
                  %333 = vst [vmem:[%s325 + $0x18] sm:$0xff] %v332
                  %v334 = vld [vmem:[%s324 + $0x40] sm:$0xff]
                  %335 = vst [vmem:[%s325 + $0x20] sm:$0xff] %v334
                  %v336 = vld [vmem:[%s324 + $0x50] sm:$0xff]
                  %337 = vst [vmem:[%s325 + $0x28] sm:$0xff] %v336
                  %v338 = vld [vmem:[%s324 + $0x60] sm:$0xff]
                  %339 = vst [vmem:[%s325 + $0x30] sm:$0xff] %v338
                  %v340 = vld [vmem:[%s324 + $0x70] sm:$0xff]
                  %341 = vst [vmem:[%s325 + $0x38] sm:$0xff] %v340
                $region72: #{_lambda_.2} parent=66 // loop_footer
                  %s323 = sadd.s32 1, %s319
                $region73: #{_lambda_.2} parent=66 // loop_footer_branch
                  %318 = sbr.rel target = $region69
                $region74: #{_lambda_.2} parent=66 // loop_exit
                  _
              $region67: #{_lambda_.2} parent=51 // pred_fallthru
                _
              // Predicated region
              $region75: #{_lambda_.2} parent=51 // pred_check
                _
              $region76: #{_lambda_.2} parent=51 // pred_check_branch
                %343 = sbr.rel target = $region78
              $region77: #{_lambda_.2} parent=51 // pred_region
                _
              $region78: #{_lambda_.2} parent=51 // pred_fallthru
                _
            $region52: #{_lambda_.2} parent=47 // pred_fallthru
              _
            // Predicated region
            $region53: #{_lambda_.2} parent=47 // pred_check
              _
            $region54: #{_lambda_.2} parent=47 // pred_check_branch
              %290 = sbr.rel target = $region56
            $region55: #{_lambda_.2} parent=47 // pred_region
              loop: start=0, step=1, limit=1
              $region57: #{_lambda_.2} parent=55 // loop_pre_header
                _
              $region58: #{_lambda_.2} parent=55 // loop_header
                %s293 = sphi 0, %s297
                %p294 = scmp.ge.s32.totalorder %s293, 1
                %s298 = sphi %s284, %s284
                %s299 = sphi %s280, %s280
              $region59: #{_lambda_.2} parent=55 // loop_header_branch
                %296 = sbr.rel (%p294) target = $region63
              $region60: #{_lambda_.2} parent=55 // loop_body
                %v300 = vld [vmem:[%s298] sm:$0xff]
                %301 = vst [vmem:[%s299] sm:$0xff] %v300
                %v302 = vld [vmem:[%s298 + $0x10] sm:$0xff]
                %303 = vst [vmem:[%s299 + $0x8] sm:$0xff] %v302
                %v304 = vld [vmem:[%s298 + $0x20] sm:$0xff]
                %305 = vst [vmem:[%s299 + $0x10] sm:$0xff] %v304
                %v306 = vld [vmem:[%s298 + $0x30] sm:$0xff]
                %307 = vst [vmem:[%s299 + $0x18] sm:$0xff] %v306
                %v308 = vld [vmem:[%s298 + $0x40] sm:$0xff]
                %309 = vst [vmem:[%s299 + $0x20] sm:$0xff] %v308
                %v310 = vld [vmem:[%s298 + $0x50] sm:$0xff]
                %311 = vst [vmem:[%s299 + $0x28] sm:$0xff] %v310
                %v312 = vld [vmem:[%s298 + $0x60] sm:$0xff]
                %313 = vst [vmem:[%s299 + $0x30] sm:$0xff] %v312
                %v314 = vld [vmem:[%s298 + $0x70] sm:$0xff]
                %315 = vst [vmem:[%s299 + $0x38] sm:$0xff] %v314
              $region61: #{_lambda_.2} parent=55 // loop_footer
                %s297 = sadd.s32 1, %s293
              $region62: #{_lambda_.2} parent=55 // loop_footer_branch
                %292 = sbr.rel target = $region58
              $region63: #{_lambda_.2} parent=55 // loop_exit
                _
            $region56: #{_lambda_.2} parent=47 // pred_fallthru
              _
          $region48: #{_lambda_.2} parent=43 // pred_fallthru
            _
          %344 = vnop
        $region44: #{_lambda_.2} parent=39 // pred_fallthru
          _
      $region40: #{_lambda_.2} parent=5 // pred_fallthru
        _
      %p345 = scmp.le.s32.totalorder 1, %s15
      %p346 = scmp.lt.s32.totalorder %s15, 5
      %p347 = pnand %p345, %p346
      %p348 = pneg %p347
      // Predicated region
      $region79: #{_lambda_.2} parent=5 // pred_check
        _
      $region80: #{_lambda_.2} parent=5 // pred_check_branch
        %350 = sbr.rel (%p347) target = $region82
      $region81: #{_lambda_.2} parent=5 // pred_region
        %s351 = ssub.s32 %s15, 1
        %s352 = sand.u32 %s42, 1
        %s353 = sand.u32 %s42, 1
        %s354 = smul.addr %s353, 64
        %s355 = scalar_lea.vmem [#allocation2], %s354
        // Predicated region
        $region83: #{_lambda_.2} parent=81 // pred_check
          %p356 = pneg %p55
        $region84: #{_lambda_.2} parent=81 // pred_check_branch
          %358 = sbr.rel (%p356) target = $region86
        $region85: #{_lambda_.2} parent=81 // pred_region
          _
        $region86: #{_lambda_.2} parent=81 // pred_fallthru
          _
        %s359 = sand.u32 %s42, 1
        %s360 = sand.u32 %s42, 1
        %s361 = smul.addr %s360, 64
        %s362 = scalar_lea.vmem [#allocation2], %s361
        %p363 = pneg %p55
        %p364 = pneg %p52
        %p365 = pneg %p76
        %p366 = pneg %p73
        %p367 = pneg %p97
        %p368 = pneg %p94
        %p369 = pneg %p118
        %p370 = pneg %p115
        %p371 = pneg %p139
        %p372 = pneg %p136
        %p373 = pneg %p160
        %p374 = pneg %p157
        %p375 = pneg %p181
        %p376 = pneg %p178
        %p377 = pneg %p209
        %p378 = pneg %p206
        %s379 = sand.u32 %s196, 1
        %s380 = sand.u32 %s196, 1
        %s381 = smul.addr %s380, 8
        %s382 = scalar_lea.vmem [#allocation3], %s381
        %p383 = pneg %p237
        %p384 = pneg %p234
        %s385 = sand.u32 %s224, 1
        %s386 = sand.u32 %s224, 1
        %s387 = smul.addr %s386, 32
        %s388 = scalar_lea.vmem [#allocation4], %s387
        %v390 = vld [vmem:[%s355] sm:$0xff]
        %v391 = vld [vmem:[%s355 + $0x8] sm:$0xff]
        %v392 = vld [vmem:[%s355 + $0x10] sm:$0xff]
        %v393 = vld [vmem:[%s355 + $0x18] sm:$0xff]
        %v394 = vld [vmem:[%s355 + $0x20] sm:$0xff]
        %v395 = vld [vmem:[%s355 + $0x28] sm:$0xff]
        %v396 = vld [vmem:[%s355 + $0x30] sm:$0xff]
        %v397 = vld [vmem:[%s355 + $0x38] sm:$0xff]
        %v398 = vpack.c.bf16 %v391, %v390
        %v399 = vpack.c.bf16 %v393, %v392
        %v400 = vpack.c.bf16 %v395, %v394
        %v401 = vpack.c.bf16 %v397, %v396
        %v402 = vld [vmem:[%s1] sm:$0xf]
        %v403 = vld [vmem:[%s1 + $0x4] sm:$0xf]
        %v406 = vunpack.c.l.b16 %v402
        %v407 = vunpack.c.l.b16 %v403
        %v408 = vpack.c.b16 %v407, %v406
        %vm409 = vcmask 523264
        %v411 = vsel %vm409, %v408, 0
        %413 = vmatprep.subr.bf16.mxu0 0
        %414 = vmatpush1.bf16.msra.mxu0 %v398
        %415 = vmatprep.subr.bf16.mxu0 0
        %416 = vmatpush1.bf16.msra.mxu0 %v399
        %417 = vmatprep.subr.bf16.mxu0 0
        %418 = vmatpush1.bf16.msra.mxu0 %v400
        %419 = vmatprep.subr.bf16.mxu0 0
        %420 = vmatpush1.bf16.msra.mxu0 %v401
        %421 = vmatprep.subr.bf16.mxu0 0
        %422 = vmatpush1.bf16.msra.mxu0 0
        %423 = vmatprep.subr.bf16.mxu0 0
        %424 = vmatpush1.bf16.msra.mxu0 0
        %425 = vmatprep.subr.bf16.mxu0 0
        %426 = vmatpush1.bf16.msra.mxu0 0
        %427 = vmatprep.subr.bf16.mxu0 0
        %428 = vmatpush1.bf16.msra.mxu0 0
        %429 = vmatprep.subr.bf16.mxu0 0
        %430 = vmatpush1.bf16.msra.mxu0 0
        %431 = vmatprep.subr.bf16.mxu0 0
        %432 = vmatpush1.bf16.msra.mxu0 0
        %433 = vmatprep.subr.bf16.mxu0 0
        %434 = vmatpush1.bf16.msra.mxu0 0
        %435 = vmatprep.subr.bf16.mxu0 0
        %436 = vmatpush1.bf16.msra.mxu0 0
        %437 = vmatprep.subr.bf16.mxu0 0
        %438 = vmatpush1.bf16.msra.mxu0 0
        %439 = vmatprep.subr.bf16.mxu0 0
        %440 = vmatpush1.bf16.msra.mxu0 0
        %441 = vmatprep.subr.bf16.mxu0 0
        %442 = vmatpush1.bf16.msra.mxu0 0
        %443 = vmatprep.subr.bf16.mxu0 0
        %444 = vmatpush1.bf16.msra.mxu0 0
        %445 = vmatprep.mubr.bf16.mxu0 0
        %446 = vmatmul.mubr.bf16.gmra.mrb[0].mxu0 %v411
        %v447 = vpop.f32.mrb[0].mxu0
        %v448 = vadd.f32 0.0, %v447
        %v449 = vpop.f32.mrb[0].mxu0
        %v450 = vpop.f32.mrb[0].mxu0
        %v451 = vadd.f32 0.0, %v450
        %v452 = vpop.f32.mrb[0].mxu0
        %453 = vdwg.mxu0
        %v454 = vld [vmem:[%s2] sm:$0xff]
        %v455 = vld [vmem:[%s2 + $0x8] sm:$0xff]
        %457 = vset.pattern.permute.xlu0 0
        %458 = vperm.xlu0 %457, %v454
        %v459 = vpop.permute.xlu0 %458
        %462 = vset.pattern.permute.xlu0 0
        %463 = vperm.xlu0 %462, %v455
        %v464 = vpop.permute.xlu0 %463
        %v466 = vmul.f32 %v448, %v459
        %v467 = vmul.f32 %v451, %v464
        %v468 = vld [vmem:[%s3] sm:$0xff]
        %v469 = vld [vmem:[%s3 + $0x8] sm:$0xff]
        %471 = vset.pattern.permute.xlu0 0
        %472 = vperm.xlu0 %471, %v468
        %v473 = vpop.permute.xlu0 %472
        %476 = vset.pattern.permute.xlu0 0
        %477 = vperm.xlu0 %476, %v469
        %v478 = vpop.permute.xlu0 %477
        %v480 = vadd.f32 %v466, %v473
        %v481 = vadd.f32 %v467, %v478
        %v482 = vmax.f32 %v480, 0.0
        %v483 = vmax.f32 %v481, 0.0
        %v484 = vpack.c.bf16 %v483, %v482
        %v486 = vunpack.c.l.b16 %v484
        %v487 = vunpack.c.h.b16 %v484
        %v488 = vpack.c.b16 %v486, %v486
        %v489 = vpack.c.b16 %v487, %v487
        %492 = vst [vmem:[%s382] sm:$0xf] %v488
        %493 = vst [vmem:[%s382 + $0x4] sm:$0xf] %v489
        %v494 = vld [vmem:[%s4] sm:$0xf]
        %v495 = vld [vmem:[%s4 + $0x4] sm:$0xf]
        %v496 = vld [vmem:[%s4 + $0x8] sm:$0xf]
        %v497 = vld [vmem:[%s4 + $0xc] sm:$0xf]
        %v498 = vld [vmem:[%s4 + $0x10] sm:$0xf]
        %v499 = vld [vmem:[%s4 + $0x14] sm:$0xf]
        %v500 = vld [vmem:[%s4 + $0x18] sm:$0xf]
        %v501 = vld [vmem:[%s4 + $0x1c] sm:$0xf]
        %v510 = vunpack.c.l.b16 %v494
        %v511 = vunpack.c.l.b16 %v495
        %v512 = vunpack.c.l.b16 %v496
        %v513 = vunpack.c.l.b16 %v497
        %v514 = vunpack.c.l.b16 %v498
        %v515 = vunpack.c.l.b16 %v499
        %v516 = vunpack.c.l.b16 %v500
        %v517 = vunpack.c.l.b16 %v501
        %v518 = vpack.c.b16 %v511, %v510
        %v519 = vpack.c.b16 %v513, %v512
        %v520 = vpack.c.b16 %v515, %v514
        %v521 = vpack.c.b16 %v517, %v516
        %vm522 = vcmask 130048
        %v524 = vsel %vm522, %v518, 0
        %v527 = vsel %vm522, %v519, 0
        %v530 = vsel %vm522, %v520, 0
        %v533 = vsel %vm522, %v521, 0
        %535 = vmatprep.subr.bf16.mxu0 0
        %536 = vmatpush1.bf16.msra.mxu0 %v484
        %537 = vmatprep.subr.bf16.mxu0 0
        %538 = vmatpush1.bf16.msra.mxu0 0
        %539 = vmatprep.subr.bf16.mxu0 0
        %540 = vmatpush1.bf16.msra.mxu0 0
        %541 = vmatprep.subr.bf16.mxu0 0
        %542 = vmatpush1.bf16.msra.mxu0 0
        %543 = vmatprep.subr.bf16.mxu0 0
        %544 = vmatpush1.bf16.msra.mxu0 0
        %545 = vmatprep.subr.bf16.mxu0 0
        %546 = vmatpush1.bf16.msra.mxu0 0
        %547 = vmatprep.subr.bf16.mxu0 0
        %548 = vmatpush1.bf16.msra.mxu0 0
        %549 = vmatprep.subr.bf16.mxu0 0
        %550 = vmatpush1.bf16.msra.mxu0 0
        %551 = vmatprep.subr.bf16.mxu0 0
        %552 = vmatpush1.bf16.msra.mxu0 0
        %553 = vmatprep.subr.bf16.mxu0 0
        %554 = vmatpush1.bf16.msra.mxu0 0
        %555 = vmatprep.subr.bf16.mxu0 0
        %556 = vmatpush1.bf16.msra.mxu0 0
        %557 = vmatprep.subr.bf16.mxu0 0
        %558 = vmatpush1.bf16.msra.mxu0 0
        %559 = vmatprep.subr.bf16.mxu0 0
        %560 = vmatpush1.bf16.msra.mxu0 0
        %561 = vmatprep.subr.bf16.mxu0 0
        %562 = vmatpush1.bf16.msra.mxu0 0
        %563 = vmatprep.subr.bf16.mxu0 0
        %564 = vmatpush1.bf16.msra.mxu0 0
        %565 = vmatprep.subr.bf16.mxu0 0
        %566 = vmatpush1.bf16.msra.mxu0 0
        %567 = vmatprep.mubr.bf16.mxu0 0
        %568 = vmatmul.mubr.bf16.gmra.mrb[0].mxu0 %v524
        %v569 = vpop.f32.mrb[0].mxu0
        %v570 = vadd.f32 0.0, %v569
        %v571 = vpop.f32.mrb[0].mxu0
        %v572 = vpop.f32.mrb[0].mxu0
        %v573 = vadd.f32 0.0, %v572
        %v574 = vpop.f32.mrb[0].mxu0
        %575 = vmatprep.mubr.bf16.mxu0 0
        %576 = vmatmul.mubr.bf16.gmra.mrb[0].mxu0 %v527
        %v577 = vpop.f32.mrb[0].mxu0
        %v578 = vadd.f32 0.0, %v577
        %v579 = vpop.f32.mrb[0].mxu0
        %v580 = vpop.f32.mrb[0].mxu0
        %v581 = vadd.f32 0.0, %v580
        %v582 = vpop.f32.mrb[0].mxu0
        %583 = vmatprep.mubr.bf16.mxu0 0
        %584 = vmatmul.mubr.bf16.gmra.mrb[0].mxu0 %v530
        %v585 = vpop.f32.mrb[0].mxu0
        %v586 = vadd.f32 0.0, %v585
        %v587 = vpop.f32.mrb[0].mxu0
        %v588 = vpop.f32.mrb[0].mxu0
        %v589 = vadd.f32 0.0, %v588
        %v590 = vpop.f32.mrb[0].mxu0
        %591 = vmatprep.mubr.bf16.mxu0 0
        %592 = vmatmul.mubr.bf16.gmra.mrb[0].mxu0 %v533
        %v593 = vpop.f32.mrb[0].mxu0
        %v594 = vadd.f32 0.0, %v593
        %v595 = vpop.f32.mrb[0].mxu0
        %v596 = vpop.f32.mrb[0].mxu0
        %v597 = vadd.f32 0.0, %v596
        %v598 = vpop.f32.mrb[0].mxu0
        %599 = vdwg.mxu0
        %v600 = vld [vmem:[%s5] sm:$0xff]
        %v601 = vld [vmem:[%s5 + $0x8] sm:$0xff]
        %v602 = vld [vmem:[%s5 + $0x10] sm:$0xff]
        %v603 = vld [vmem:[%s5 + $0x18] sm:$0xff]
        %v604 = vld [vmem:[%s5 + $0x20] sm:$0xff]
        %v605 = vld [vmem:[%s5 + $0x28] sm:$0xff]
        %v606 = vld [vmem:[%s5 + $0x30] sm:$0xff]
        %v607 = vld [vmem:[%s5 + $0x38] sm:$0xff]
        %609 = vset.pattern.permute.xlu0 0
        %610 = vperm.xlu0 %609, %v600
        %v611 = vpop.permute.xlu0 %610
        %614 = vset.pattern.permute.xlu0 0
        %615 = vperm.xlu0 %614, %v601
        %v616 = vpop.permute.xlu0 %615
        %619 = vset.pattern.permute.xlu0 0
        %620 = vperm.xlu0 %619, %v602
        %v621 = vpop.permute.xlu0 %620
        %624 = vset.pattern.permute.xlu0 0
        %625 = vperm.xlu0 %624, %v603
        %v626 = vpop.permute.xlu0 %625
        %629 = vset.pattern.permute.xlu0 0
        %630 = vperm.xlu0 %629, %v604
        %v631 = vpop.permute.xlu0 %630
        %634 = vset.pattern.permute.xlu0 0
        %635 = vperm.xlu0 %634, %v605
        %v636 = vpop.permute.xlu0 %635
        %639 = vset.pattern.permute.xlu0 0
        %640 = vperm.xlu0 %639, %v606
        %v641 = vpop.permute.xlu0 %640
        %644 = vset.pattern.permute.xlu0 0
        %645 = vperm.xlu0 %644, %v607
        %v646 = vpop.permute.xlu0 %645
        %v648 = vmul.f32 %v570, %v611
        %v649 = vmul.f32 %v573, %v616
        %v650 = vmul.f32 %v578, %v621
        %v651 = vmul.f32 %v581, %v626
        %v652 = vmul.f32 %v586, %v631
        %v653 = vmul.f32 %v589, %v636
        %v654 = vmul.f32 %v594, %v641
        %v655 = vmul.f32 %v597, %v646
        %v656 = vld [vmem:[%s6] sm:$0xff]
        %v657 = vld [vmem:[%s6 + $0x8] sm:$0xff]
        %v658 = vld [vmem:[%s6 + $0x10] sm:$0xff]
        %v659 = vld [vmem:[%s6 + $0x18] sm:$0xff]
        %v660 = vld [vmem:[%s6 + $0x20] sm:$0xff]
        %v661 = vld [vmem:[%s6 + $0x28] sm:$0xff]
        %v662 = vld [vmem:[%s6 + $0x30] sm:$0xff]
        %v663 = vld [vmem:[%s6 + $0x38] sm:$0xff]
        %665 = vset.pattern.permute.xlu0 0
        %666 = vperm.xlu0 %665, %v656
        %v667 = vpop.permute.xlu0 %666
        %670 = vset.pattern.permute.xlu0 0
        %671 = vperm.xlu0 %670, %v657
        %v672 = vpop.permute.xlu0 %671
        %675 = vset.pattern.permute.xlu0 0
        %676 = vperm.xlu0 %675, %v658
        %v677 = vpop.permute.xlu0 %676
        %680 = vset.pattern.permute.xlu0 0
        %681 = vperm.xlu0 %680, %v659
        %v682 = vpop.permute.xlu0 %681
        %685 = vset.pattern.permute.xlu0 0
        %686 = vperm.xlu0 %685, %v660
        %v687 = vpop.permute.xlu0 %686
        %690 = vset.pattern.permute.xlu0 0
        %691 = vperm.xlu0 %690, %v661
        %v692 = vpop.permute.xlu0 %691
        %695 = vset.pattern.permute.xlu0 0
        %696 = vperm.xlu0 %695, %v662
        %v697 = vpop.permute.xlu0 %696
        %700 = vset.pattern.permute.xlu0 0
        %701 = vperm.xlu0 %700, %v663
        %v702 = vpop.permute.xlu0 %701
        %v704 = vadd.f32 %v648, %v667
        %v705 = vadd.f32 %v649, %v672
        %v706 = vadd.f32 %v650, %v677
        %v707 = vadd.f32 %v651, %v682
        %v708 = vadd.f32 %v652, %v687
        %v709 = vadd.f32 %v653, %v692
        %v710 = vadd.f32 %v654, %v697
        %v711 = vadd.f32 %v655, %v702
        %v712 = vmax.f32 %v704, 0.0
        %v713 = vmax.f32 %v705, 0.0
        %v714 = vmax.f32 %v706, 0.0
        %v715 = vmax.f32 %v707, 0.0
        %v716 = vmax.f32 %v708, 0.0
        %v717 = vmax.f32 %v709, 0.0
        %v718 = vmax.f32 %v710, 0.0
        %v719 = vmax.f32 %v711, 0.0
        %v720 = vpack.c.bf16 %v713, %v712
        %v721 = vpack.c.bf16 %v715, %v714
        %v722 = vpack.c.bf16 %v717, %v716
        %v723 = vpack.c.bf16 %v719, %v718
        %v728 = vunpack.c.l.b16 %v720
        %v729 = vunpack.c.h.b16 %v720
        %v730 = vunpack.c.l.b16 %v721
        %v731 = vunpack.c.h.b16 %v721
        %v732 = vunpack.c.l.b16 %v722
        %v733 = vunpack.c.h.b16 %v722
        %v734 = vunpack.c.l.b16 %v723
        %v735 = vunpack.c.h.b16 %v723
        %v736 = vpack.c.b16 %v728, %v728
        %v737 = vpack.c.b16 %v729, %v729
        %v738 = vpack.c.b16 %v730, %v730
        %v739 = vpack.c.b16 %v731, %v731
        %v740 = vpack.c.b16 %v732, %v732
        %v741 = vpack.c.b16 %v733, %v733
        %v742 = vpack.c.b16 %v734, %v734
        %v743 = vpack.c.b16 %v735, %v735
        %752 = vst [vmem:[%s388] sm:$0xf] %v736
        %753 = vst [vmem:[%s388 + $0x4] sm:$0xf] %v737
        %754 = vst [vmem:[%s388 + $0x8] sm:$0xf] %v738
        %755 = vst [vmem:[%s388 + $0xc] sm:$0xf] %v739
        %756 = vst [vmem:[%s388 + $0x10] sm:$0xf] %v740
        %757 = vst [vmem:[%s388 + $0x14] sm:$0xf] %v741
        %758 = vst [vmem:[%s388 + $0x18] sm:$0xf] %v742
        %759 = vst [vmem:[%s388 + $0x1c] sm:$0xf] %v743
        %s760 = sand.u32 %s196, 1
        %s761 = sand.u32 %s196, 1
        %s762 = smul.addr %s761, 8
        %s763 = scalar_lea.vmem [#allocation3], %s762
        %s764 = sand.u32 %s224, 1
        %s765 = sand.u32 %s224, 1
        %s766 = smul.addr %s765, 32
        %s767 = scalar_lea.vmem [#allocation4], %s766
        // Predicated region
        $region87: #{_lambda_.2} parent=81 // pred_check
          %p768 = pneg %p206
        $region88: #{_lambda_.2} parent=81 // pred_check_branch
          %770 = sbr.rel (%p768) target = $region90
        $region89: #{_lambda_.2} parent=81 // pred_region
          %s771 = smul.addr %s24, 4
          %s772 = sadd.s32 %s25, %s771
          %s773 = smul.addr %s772, 4
          %s774 = scalar_lea.vmem %s7, %s773
          // Predicated region
          $region91: #{_lambda_.2} parent=89 // pred_check
            _
          $region92: #{_lambda_.2} parent=89 // pred_check_branch
            %776 = sbr.rel (0) target = $region94
          $region93: #{_lambda_.2} parent=89 // pred_region
            // Predicated region
            $region95: #{_lambda_.2} parent=93 // pred_check
              _
            $region96: #{_lambda_.2} parent=93 // pred_check_branch
              %778 = sbr.rel target = $region98
            $region97: #{_lambda_.2} parent=93 // pred_region
              // Predicated region
              $region110: #{_lambda_.2} parent=97 // pred_check
                _
              $region111: #{_lambda_.2} parent=97 // pred_check_branch
                %795 = sbr.rel (0) target = $region113
              $region112: #{_lambda_.2} parent=97 // pred_region
                loop: start=0, step=1, limit=1
                $region114: #{_lambda_.2} parent=112 // loop_pre_header
                  _
                $region115: #{_lambda_.2} parent=112 // loop_header
                  %s797 = sphi 0, %s801
                  %p798 = scmp.ge.s32.totalorder %s797, 1
                  %s802 = sphi %s763, %s763
                  %s803 = sphi %s774, %s774
                $region116: #{_lambda_.2} parent=112 // loop_header_branch
                  %800 = sbr.rel (%p798) target = $region120
                $region117: #{_lambda_.2} parent=112 // loop_body
                  _
                $region118: #{_lambda_.2} parent=112 // loop_footer
                  %s801 = sadd.s32 1, %s797
                $region119: #{_lambda_.2} parent=112 // loop_footer_branch
                  %796 = sbr.rel target = $region115
                $region120: #{_lambda_.2} parent=112 // loop_exit
                  _
                loop: start=0, step=1, limit=1
                $region121: #{_lambda_.2} parent=112 // loop_pre_header
                  _
                $region122: #{_lambda_.2} parent=112 // loop_header
                  %s806 = sphi 0, %s810
                  %p807 = scmp.ge.s32.totalorder %s806, 1
                  %s811 = sphi %s763, %s763
                  %s812 = sphi %s774, %s774
                $region123: #{_lambda_.2} parent=112 // loop_header_branch
                  %809 = sbr.rel (%p807) target = $region127
                $region124: #{_lambda_.2} parent=112 // loop_body
                  %v813 = vld [vmem:[%s811] sm:$0xf]
                  %814 = vst [vmem:[%s812] sm:$0xf] %v813
                  %v815 = vld [vmem:[%s811 + $0x4] sm:$0xf]
                  %816 = vst [vmem:[%s812 + $0x8] sm:$0xf] %v815
                $region125: #{_lambda_.2} parent=112 // loop_footer
                  %s810 = sadd.s32 1, %s806
                $region126: #{_lambda_.2} parent=112 // loop_footer_branch
                  %805 = sbr.rel target = $region122
                $region127: #{_lambda_.2} parent=112 // loop_exit
                  _
              $region113: #{_lambda_.2} parent=97 // pred_fallthru
                _
            $region98: #{_lambda_.2} parent=93 // pred_fallthru
              _
            // Predicated region
            $region99: #{_lambda_.2} parent=93 // pred_check
              _
            $region100: #{_lambda_.2} parent=93 // pred_check_branch
              %780 = sbr.rel (0) target = $region102
            $region101: #{_lambda_.2} parent=93 // pred_region
              loop: start=0, step=1, limit=1
              $region103: #{_lambda_.2} parent=101 // loop_pre_header
                _
              $region104: #{_lambda_.2} parent=101 // loop_header
                %s783 = sphi 0, %s787
                %p784 = scmp.ge.s32.totalorder %s783, 1
                %s788 = sphi %s763, %s763
                %s789 = sphi %s774, %s774
              $region105: #{_lambda_.2} parent=101 // loop_header_branch
                %786 = sbr.rel (%p784) target = $region109
              $region106: #{_lambda_.2} parent=101 // loop_body
                %v790 = vld [vmem:[%s788] sm:$0xf]
                %791 = vst [vmem:[%s789] sm:$0xf] %v790
                %v792 = vld [vmem:[%s788 + $0x4] sm:$0xf]
                %793 = vst [vmem:[%s789 + $0x8] sm:$0xf] %v792
              $region107: #{_lambda_.2} parent=101 // loop_footer
                %s787 = sadd.s32 1, %s783
              $region108: #{_lambda_.2} parent=101 // loop_footer_branch
                %782 = sbr.rel target = $region104
              $region109: #{_lambda_.2} parent=101 // loop_exit
                _
            $region102: #{_lambda_.2} parent=93 // pred_fallthru
              _
          $region94: #{_lambda_.2} parent=89 // pred_fallthru
            _
          %817 = vnop
        $region90: #{_lambda_.2} parent=81 // pred_fallthru
          _
        // Predicated region
        $region128: #{_lambda_.2} parent=81 // pred_check
          %p818 = pneg %p234
        $region129: #{_lambda_.2} parent=81 // pred_check_branch
          %820 = sbr.rel (%p818) target = $region131
        $region130: #{_lambda_.2} parent=81 // pred_region
          %s821 = smul.addr %s24, 16
          %s822 = sadd.s32 %s25, %s821
          %s823 = smul.addr %s822, 4
          %s824 = scalar_lea.vmem %s8, %s823
          // Predicated region
          $region132: #{_lambda_.2} parent=130 // pred_check
            _
          $region133: #{_lambda_.2} parent=130 // pred_check_branch
            %826 = sbr.rel (0) target = $region135
          $region134: #{_lambda_.2} parent=130 // pred_region
            // Predicated region
            $region136: #{_lambda_.2} parent=134 // pred_check
              _
            $region137: #{_lambda_.2} parent=134 // pred_check_branch
              %828 = sbr.rel target = $region139
            $region138: #{_lambda_.2} parent=134 // pred_region
              // Predicated region
              $region151: #{_lambda_.2} parent=138 // pred_check
                _
              $region152: #{_lambda_.2} parent=138 // pred_check_branch
                %857 = sbr.rel (0) target = $region154
              $region153: #{_lambda_.2} parent=138 // pred_region
                loop: start=0, step=1, limit=1
                $region155: #{_lambda_.2} parent=153 // loop_pre_header
                  _
                $region156: #{_lambda_.2} parent=153 // loop_header
                  %s859 = sphi 0, %s863
                  %p860 = scmp.ge.s32.totalorder %s859, 1
                  %s864 = sphi %s767, %s767
                  %s865 = sphi %s824, %s824
                $region157: #{_lambda_.2} parent=153 // loop_header_branch
                  %862 = sbr.rel (%p860) target = $region161
                $region158: #{_lambda_.2} parent=153 // loop_body
                  _
                $region159: #{_lambda_.2} parent=153 // loop_footer
                  %s863 = sadd.s32 1, %s859
                $region160: #{_lambda_.2} parent=153 // loop_footer_branch
                  %858 = sbr.rel target = $region156
                $region161: #{_lambda_.2} parent=153 // loop_exit
                  _
                loop: start=0, step=1, limit=1
                $region162: #{_lambda_.2} parent=153 // loop_pre_header
                  _
                $region163: #{_lambda_.2} parent=153 // loop_header
                  %s868 = sphi 0, %s872
                  %p869 = scmp.ge.s32.totalorder %s868, 1
                  %s873 = sphi %s767, %s767
                  %s874 = sphi %s824, %s824
                $region164: #{_lambda_.2} parent=153 // loop_header_branch
                  %871 = sbr.rel (%p869) target = $region168
                $region165: #{_lambda_.2} parent=153 // loop_body
                  %v875 = vld [vmem:[%s873] sm:$0xf]
                  %876 = vst [vmem:[%s874] sm:$0xf] %v875
                  %v877 = vld [vmem:[%s873 + $0x4] sm:$0xf]
                  %878 = vst [vmem:[%s874 + $0x8] sm:$0xf] %v877
                  %v879 = vld [vmem:[%s873 + $0x8] sm:$0xf]
                  %880 = vst [vmem:[%s874 + $0x10] sm:$0xf] %v879
                  %v881 = vld [vmem:[%s873 + $0xc] sm:$0xf]
                  %882 = vst [vmem:[%s874 + $0x18] sm:$0xf] %v881
                  %v883 = vld [vmem:[%s873 + $0x10] sm:$0xf]
                  %884 = vst [vmem:[%s874 + $0x20] sm:$0xf] %v883
                  %v885 = vld [vmem:[%s873 + $0x14] sm:$0xf]
                  %886 = vst [vmem:[%s874 + $0x28] sm:$0xf] %v885
                  %v887 = vld [vmem:[%s873 + $0x18] sm:$0xf]
                  %888 = vst [vmem:[%s874 + $0x30] sm:$0xf] %v887
                  %v889 = vld [vmem:[%s873 + $0x1c] sm:$0xf]
                  %890 = vst [vmem:[%s874 + $0x38] sm:$0xf] %v889
                $region166: #{_lambda_.2} parent=153 // loop_footer
                  %s872 = sadd.s32 1, %s868
                $region167: #{_lambda_.2} parent=153 // loop_footer_branch
                  %867 = sbr.rel target = $region163
                $region168: #{_lambda_.2} parent=153 // loop_exit
                  _
              $region154: #{_lambda_.2} parent=138 // pred_fallthru
                _
            $region139: #{_lambda_.2} parent=134 // pred_fallthru
              _
            // Predicated region
            $region140: #{_lambda_.2} parent=134 // pred_check
              _
            $region141: #{_lambda_.2} parent=134 // pred_check_branch
              %830 = sbr.rel (0) target = $region143
            $region142: #{_lambda_.2} parent=134 // pred_region
              loop: start=0, step=1, limit=1
              $region144: #{_lambda_.2} parent=142 // loop_pre_header
                _
              $region145: #{_lambda_.2} parent=142 // loop_header
                %s833 = sphi 0, %s837
                %p834 = scmp.ge.s32.totalorder %s833, 1
                %s838 = sphi %s767, %s767
                %s839 = sphi %s824, %s824
              $region146: #{_lambda_.2} parent=142 // loop_header_branch
                %836 = sbr.rel (%p834) target = $region150
              $region147: #{_lambda_.2} parent=142 // loop_body
                %v840 = vld [vmem:[%s838] sm:$0xf]
                %841 = vst [vmem:[%s839] sm:$0xf] %v840
                %v842 = vld [vmem:[%s838 + $0x4] sm:$0xf]
                %843 = vst [vmem:[%s839 + $0x8] sm:$0xf] %v842
                %v844 = vld [vmem:[%s838 + $0x8] sm:$0xf]
                %845 = vst [vmem:[%s839 + $0x10] sm:$0xf] %v844
                %v846 = vld [vmem:[%s838 + $0xc] sm:$0xf]
                %847 = vst [vmem:[%s839 + $0x18] sm:$0xf] %v846
                %v848 = vld [vmem:[%s838 + $0x10] sm:$0xf]
                %849 = vst [vmem:[%s839 + $0x20] sm:$0xf] %v848
                %v850 = vld [vmem:[%s838 + $0x14] sm:$0xf]
                %851 = vst [vmem:[%s839 + $0x28] sm:$0xf] %v850
                %v852 = vld [vmem:[%s838 + $0x18] sm:$0xf]
                %853 = vst [vmem:[%s839 + $0x30] sm:$0xf] %v852
                %v854 = vld [vmem:[%s838 + $0x1c] sm:$0xf]
                %855 = vst [vmem:[%s839 + $0x38] sm:$0xf] %v854
              $region148: #{_lambda_.2} parent=142 // loop_footer
                %s837 = sadd.s32 1, %s833
              $region149: #{_lambda_.2} parent=142 // loop_footer_branch
                %832 = sbr.rel target = $region145
              $region150: #{_lambda_.2} parent=142 // loop_exit
                _
            $region143: #{_lambda_.2} parent=134 // pred_fallthru
              _
          $region135: #{_lambda_.2} parent=130 // pred_fallthru
            _
          %891 = vnop
        $region131: #{_lambda_.2} parent=81 // pred_fallthru
          _
      $region82: #{_lambda_.2} parent=5 // pred_fallthru
        _
      %p892 = scmp.le.s32.totalorder 2, %s15
      // Predicated region
      $region169: #{_lambda_.2} parent=5 // pred_check
        %p893 = pneg %p892
      $region170: #{_lambda_.2} parent=5 // pred_check_branch
        %895 = sbr.rel (%p893) target = $region172
      $region171: #{_lambda_.2} parent=5 // pred_region
        %s896 = ssub.s32 %s15, 2
        // Predicated region
        $region173: #{_lambda_.2} parent=171 // pred_check
          %p897 = pneg %p212
        $region174: #{_lambda_.2} parent=171 // pred_check_branch
          %899 = sbr.rel (%p897) target = $region176
        $region175: #{_lambda_.2} parent=171 // pred_region
          %s900 = sand.u32 %s197, 1
          %s901 = sand.u32 %s197, 1
          %s902 = smul.addr %s901, 8
          %s903 = scalar_lea.vmem [#allocation3], %s902
        $region176: #{_lambda_.2} parent=171 // pred_fallthru
          _
        // Predicated region
        $region177: #{_lambda_.2} parent=171 // pred_check
          %p904 = pneg %p240
        $region178: #{_lambda_.2} parent=171 // pred_check_branch
          %906 = sbr.rel (%p904) target = $region180
        $region179: #{_lambda_.2} parent=171 // pred_region
          %s907 = sand.u32 %s225, 1
          %s908 = sand.u32 %s225, 1
          %s909 = smul.addr %s908, 32
          %s910 = scalar_lea.vmem [#allocation4], %s909
        $region180: #{_lambda_.2} parent=171 // pred_fallthru
          _
      $region172: #{_lambda_.2} parent=5 // pred_fallthru
        _
    $region6: #{_lambda_.2} parent=1 // loop_footer
      %s19 = sadd.s32 1, %s15
    $region7: #{_lambda_.2} parent=1 // loop_footer_branch
      %14 = sbr.rel target = $region3
    $region8: #{_lambda_.2} parent=1 // loop_exit
      _

// kernel: _lambda_.3
$region0: #{_lambda_.3}
  #allocation0 [shape = 'u32[]', space=smem, size = 0x4, offset = 0x4, fixed_abs, tag = 'smem constant byte address 0x4 - core index']
  #allocation1 [shape = 'u32[144,128]{1,0:T(1,128)}', space=vmem, size = 0x12000, scoped, tag = 'internal scratch']
  %s0 = inlined_call_operand.vmem [shape: bf16[2,144,256], index: 0, kind: input, shape index: {}]
  %s1 = inlined_call_operand.vmem [shape: f32[2,9,256], index: 1, kind: input, shape index: {}]
  %s2 = inlined_call_operand.vmem [shape: bf16[2,64,256], index: 2, kind: input, shape index: {}]
  %s3 = inlined_call_operand.vmem [shape: bf16[64,144], index: 3, kind: input, shape index: {}]
  %s4 = inlined_call_operand.vmem [shape: f32[64,1], index: 4, kind: input, shape index: {}]
  %s5 = inlined_call_operand.vmem [shape: f32[64,1], index: 5, kind: input, shape index: {}]
  %s6 = inlined_call_operand.vmem [shape: f32[64,1], index: 6, kind: input, shape index: {}]
  %s7 = inlined_call_operand.vmem [shape: f32[64,1], index: 7, kind: input, shape index: {}]
  %s8 = inlined_call_operand.vmem [shape: bf16[2,128,256], index: 8, kind: output, shape index: {}]
  %s9 = sld [smem:[#allocation0]]
  $region222: #{_lambda_.3} parent=0
    _
  %s11 = ssub.s32 1, %s9
  %s12 = scalar_select 0, %s11, %s9
  $region1: #{_lambda_.3} parent=0
    #allocation2 [shape = 'u8[73728]{0}', space=vmem, size = 0x12000, scoped, tag = 'input window, operand 0']
    #allocation3 [shape = 'u8[16384]{0}', space=vmem, size = 0x4000, scoped, tag = 'input window, operand 1']
    #allocation4 [shape = 'u8[32768]{0}', space=vmem, size = 0x8000, scoped, tag = 'input window, operand 2']
    #allocation5 [shape = 'u8[65536]{0}', space=vmem, size = 0x10000, scoped, tag = 'output window, operand 0']
    loop: start=0, step=1, limit=6
    $region2: #{_lambda_.3} parent=1 // loop_pre_header
      _
    $region3: #{_lambda_.3} parent=1 // loop_header
      %s14 = sphi 0, %s18
      %p15 = scmp.ge.s32.totalorder %s14, 6
      %s21 = sphi 0, %s33
      %s22 = sphi 0, %s29
      %s23 = sphi 0, %s21
      %s24 = sphi 0, %s22
      %s25 = sphi 0, %s23
      %s26 = sphi 0, %s24
      %s38 = sphi 0, %s40
      %s41 = sphi 0, %s38
      %s42 = sphi 0, %s41
      %s58 = sphi 0, %s42
      %s66 = sphi 0, %s68
      %s69 = sphi 0, %s66
      %s70 = sphi 0, %s69
      %s86 = sphi 0, %s70
      %s94 = sphi 0, %s96
      %s97 = sphi 0, %s94
      %s98 = sphi 0, %s97
      %s114 = sphi 0, %s98
      %s118 = sphi 0, %s118
      %s120 = sphi 0, %s118
      %s121 = sphi 0, %s120
      %s135 = sphi 0, %s121
      %s139 = sphi 0, %s139
      %s141 = sphi 0, %s139
      %s142 = sphi 0, %s141
      %s156 = sphi 0, %s142
      %s160 = sphi 0, %s160
      %s162 = sphi 0, %s160
      %s163 = sphi 0, %s162
      %s177 = sphi 0, %s163
      %s181 = sphi 0, %s181
      %s183 = sphi 0, %s181
      %s184 = sphi 0, %s183
      %s198 = sphi 0, %s184
      %s202 = sphi 0, %s202
      %s204 = sphi 0, %s202
      %s205 = sphi 0, %s204
      %s219 = sphi 0, %s205
      %s227 = sphi 0, %s229
      %s230 = sphi 0, %s227
      %s231 = sphi 0, %s230
      %s247 = sphi 0, %s231
    $region4: #{_lambda_.3} parent=1 // loop_header_branch
      %17 = sbr.rel (%p15) target = $region8
    $region5: #{_lambda_.3} parent=1 // loop_body
      %s19 = ssub.s32 %s14, 1
      %s20 = ssub.s32 %s14, 2
      %s27 = sadd.s32 1, %s22
      %p28 = scmp.ge.s32.totalorder %s27, 2
      %s29 = scalar_select %p28, 0, %s27
      %s30 = sadd.s32 1, %s21
      %s31 = scalar_select %p28, %s30, %s21
      %p32 = scmp.ge.s32.totalorder %s31, 2
      %s33 = scalar_select %p32, 0, %s31
      %s34 = ssub.s32 %s21, %s33
      %s35 = ssub.s32 %s22, %s29
      %s36 = sor.u32 %s34, %s35
      %p37 = scmp.eq.s32.totalorder %s36, 0
      %s39 = sadd.s32 %s38, 1
      %s40 = scalar_select %p37, %s38, %s39
      %p43 = pneg %p37
      %p44 = scmp.eq.s32.totalorder %s14, 3
      %p45 = por %p43, %p44
      %p46 = scmp.ne.s32.totalorder %s38, %s41
      %p47 = scmp.eq.s32.totalorder %s14, 0
      %p48 = por %p46, %p47
      %p49 = scmp.ne.s32.totalorder %s38, %s41
      %p50 = scmp.eq.s32.totalorder %s19, 3
      %p51 = por %p49, %p50
      %p52 = scmp.ne.s32.totalorder %s41, %s42
      %p53 = scmp.eq.s32.totalorder %s19, 0
      %p54 = por %p52, %p53
      %p55 = scmp.ne.s32.totalorder %s41, %s42
      %p56 = scmp.eq.s32.totalorder %s20, 3
      %p57 = por %p55, %p56
      %p59 = scmp.ne.s32.totalorder %s42, %s58
      %p60 = scmp.eq.s32.totalorder %s20, 0
      %p61 = por %p59, %p60
      %s62 = ssub.s32 %s21, %s33
      %s63 = ssub.s32 %s22, %s29
      %s64 = sor.u32 %s62, %s63
      %p65 = scmp.eq.s32.totalorder %s64, 0
      %s67 = sadd.s32 %s66, 1
      %s68 = scalar_select %p65, %s66, %s67
      %p71 = pneg %p65
      %p72 = scmp.eq.s32.totalorder %s14, 3
      %p73 = por %p71, %p72
      %p74 = scmp.ne.s32.totalorder %s66, %s69
      %p75 = scmp.eq.s32.totalorder %s14, 0
      %p76 = por %p74, %p75
      %p77 = scmp.ne.s32.totalorder %s66, %s69
      %p78 = scmp.eq.s32.totalorder %s19, 3
      %p79 = por %p77, %p78
      %p80 = scmp.ne.s32.totalorder %s69, %s70
      %p81 = scmp.eq.s32.totalorder %s19, 0
      %p82 = por %p80, %p81
      %p83 = scmp.ne.s32.totalorder %s69, %s70
      %p84 = scmp.eq.s32.totalorder %s20, 3
      %p85 = por %p83, %p84
      %p87 = scmp.ne.s32.totalorder %s70, %s86
      %p88 = scmp.eq.s32.totalorder %s20, 0
      %p89 = por %p87, %p88
      %s90 = ssub.s32 %s21, %s33
      %s91 = ssub.s32 %s22, %s29
      %s92 = sor.u32 %s90, %s91
      %p93 = scmp.eq.s32.totalorder %s92, 0
      %s95 = sadd.s32 %s94, 1
      %s96 = scalar_select %p93, %s94, %s95
      %p99 = pneg %p93
      %p100 = scmp.eq.s32.totalorder %s14, 3
      %p101 = por %p99, %p100
      %p102 = scmp.ne.s32.totalorder %s94, %s97
      %p103 = scmp.eq.s32.totalorder %s14, 0
      %p104 = por %p102, %p103
      %p105 = scmp.ne.s32.totalorder %s94, %s97
      %p106 = scmp.eq.s32.totalorder %s19, 3
      %p107 = por %p105, %p106
      %p108 = scmp.ne.s32.totalorder %s97, %s98
      %p109 = scmp.eq.s32.totalorder %s19, 0
      %p110 = por %p108, %p109
      %p111 = scmp.ne.s32.totalorder %s97, %s98
      %p112 = scmp.eq.s32.totalorder %s20, 3
      %p113 = por %p111, %p112
      %p115 = scmp.ne.s32.totalorder %s98, %s114
      %p116 = scmp.eq.s32.totalorder %s20, 0
      %p117 = por %p115, %p116
      %s119 = sadd.s32 %s118, 1
      %p122 = scmp.eq.s32.totalorder %s14, 3
      %p123 = scmp.ne.s32.totalorder %s118, %s120
      %p124 = scmp.eq.s32.totalorder %s14, 0
      %p125 = por %p123, %p124
      %p126 = scmp.ne.s32.totalorder %s118, %s120
      %p127 = scmp.eq.s32.totalorder %s19, 3
      %p128 = por %p126, %p127
      %p129 = scmp.ne.s32.totalorder %s120, %s121
      %p130 = scmp.eq.s32.totalorder %s19, 0
      %p131 = por %p129, %p130
      %p132 = scmp.ne.s32.totalorder %s120, %s121
      %p133 = scmp.eq.s32.totalorder %s20, 3
      %p134 = por %p132, %p133
      %p136 = scmp.ne.s32.totalorder %s121, %s135
      %p137 = scmp.eq.s32.totalorder %s20, 0
      %p138 = por %p136, %p137
      %s140 = sadd.s32 %s139, 1
      %p143 = scmp.eq.s32.totalorder %s14, 3
      %p144 = scmp.ne.s32.totalorder %s139, %s141
      %p145 = scmp.eq.s32.totalorder %s14, 0
      %p146 = por %p144, %p145
      %p147 = scmp.ne.s32.totalorder %s139, %s141
      %p148 = scmp.eq.s32.totalorder %s19, 3
      %p149 = por %p147, %p148
      %p150 = scmp.ne.s32.totalorder %s141, %s142
      %p151 = scmp.eq.s32.totalorder %s19, 0
      %p152 = por %p150, %p151
      %p153 = scmp.ne.s32.totalorder %s141, %s142
      %p154 = scmp.eq.s32.totalorder %s20, 3
      %p155 = por %p153, %p154
      %p157 = scmp.ne.s32.totalorder %s142, %s156
      %p158 = scmp.eq.s32.totalorder %s20, 0
      %p159 = por %p157, %p158
      %s161 = sadd.s32 %s160, 1
      %p164 = scmp.eq.s32.totalorder %s14, 3
      %p165 = scmp.ne.s32.totalorder %s160, %s162
      %p166 = scmp.eq.s32.totalorder %s14, 0
      %p167 = por %p165, %p166
      %p168 = scmp.ne.s32.totalorder %s160, %s162
      %p169 = scmp.eq.s32.totalorder %s19, 3
      %p170 = por %p168, %p169
      %p171 = scmp.ne.s32.totalorder %s162, %s163
      %p172 = scmp.eq.s32.totalorder %s19, 0
      %p173 = por %p171, %p172
      %p174 = scmp.ne.s32.totalorder %s162, %s163
      %p175 = scmp.eq.s32.totalorder %s20, 3
      %p176 = por %p174, %p175
      %p178 = scmp.ne.s32.totalorder %s163, %s177
      %p179 = scmp.eq.s32.totalorder %s20, 0
      %p180 = por %p178, %p179
      %s182 = sadd.s32 %s181, 1
      %p185 = scmp.eq.s32.totalorder %s14, 3
      %p186 = scmp.ne.s32.totalorder %s181, %s183
      %p187 = scmp.eq.s32.totalorder %s14, 0
      %p188 = por %p186, %p187
      %p189 = scmp.ne.s32.totalorder %s181, %s183
      %p190 = scmp.eq.s32.totalorder %s19, 3
      %p191 = por %p189, %p190
      %p192 = scmp.ne.s32.totalorder %s183, %s184
      %p193 = scmp.eq.s32.totalorder %s19, 0
      %p194 = por %p192, %p193
      %p195 = scmp.ne.s32.totalorder %s183, %s184
      %p196 = scmp.eq.s32.totalorder %s20, 3
      %p197 = por %p195, %p196
      %p199 = scmp.ne.s32.totalorder %s184, %s198
      %p200 = scmp.eq.s32.totalorder %s20, 0
      %p201 = por %p199, %p200
      %s203 = sadd.s32 %s202, 1
      %p206 = scmp.eq.s32.totalorder %s14, 3
      %p207 = scmp.ne.s32.totalorder %s202, %s204
      %p208 = scmp.eq.s32.totalorder %s14, 0
      %p209 = por %p207, %p208
      %p210 = scmp.ne.s32.totalorder %s202, %s204
      %p211 = scmp.eq.s32.totalorder %s19, 3
      %p212 = por %p210, %p211
      %p213 = scmp.ne.s32.totalorder %s204, %s205
      %p214 = scmp.eq.s32.totalorder %s19, 0
      %p215 = por %p213, %p214
      %p216 = scmp.ne.s32.totalorder %s204, %s205
      %p217 = scmp.eq.s32.totalorder %s20, 3
      %p218 = por %p216, %p217
      %p220 = scmp.ne.s32.totalorder %s205, %s219
      %p221 = scmp.eq.s32.totalorder %s20, 0
      %p222 = por %p220, %p221
      %s223 = ssub.s32 %s21, %s33
      %s224 = ssub.s32 %s22, %s29
      %s225 = sor.u32 %s223, %s224
      %p226 = scmp.eq.s32.totalorder %s225, 0
      %s228 = sadd.s32 %s227, 1
      %s229 = scalar_select %p226, %s227, %s228
      %p232 = pneg %p226
      %p233 = scmp.eq.s32.totalorder %s14, 3
      %p234 = por %p232, %p233
      %p235 = scmp.ne.s32.totalorder %s227, %s230
      %p236 = scmp.eq.s32.totalorder %s14, 0
      %p237 = por %p235, %p236
      %p238 = scmp.ne.s32.totalorder %s227, %s230
      %p239 = scmp.eq.s32.totalorder %s19, 3
      %p240 = por %p238, %p239
      %p241 = scmp.ne.s32.totalorder %s230, %s231
      %p242 = scmp.eq.s32.totalorder %s19, 0
      %p243 = por %p241, %p242
      %p244 = scmp.ne.s32.totalorder %s230, %s231
      %p245 = scmp.eq.s32.totalorder %s20, 3
      %p246 = por %p244, %p245
      %p248 = scmp.ne.s32.totalorder %s231, %s247
      %p249 = scmp.eq.s32.totalorder %s20, 0
      %p250 = por %p248, %p249
      %p251 = scmp.le.s32.totalorder 1, %s14
      %p252 = scmp.lt.s32.totalorder %s14, 5
      %p253 = pnand %p251, %p252
      %p254 = pneg %p253
      // Predicated region
      $region9: #{_lambda_.3} parent=5 // pred_check
        _
      $region10: #{_lambda_.3} parent=5 // pred_check_branch
        %256 = sbr.rel (%p253) target = $region12
      $region11: #{_lambda_.3} parent=5 // pred_region
        %s257 = ssub.s32 %s14, 1
        // Predicated region
        $region13: #{_lambda_.3} parent=11 // pred_check
          %p258 = pneg %p131
        $region14: #{_lambda_.3} parent=11 // pred_check_branch
          %260 = sbr.rel (%p258) target = $region16
        $region15: #{_lambda_.3} parent=11 // pred_region
          _
        $region16: #{_lambda_.3} parent=11 // pred_fallthru
          _
        // Predicated region
        $region17: #{_lambda_.3} parent=11 // pred_check
          %p261 = pneg %p152
        $region18: #{_lambda_.3} parent=11 // pred_check_branch
          %263 = sbr.rel (%p261) target = $region20
        $region19: #{_lambda_.3} parent=11 // pred_region
          _
        $region20: #{_lambda_.3} parent=11 // pred_fallthru
          _
        // Predicated region
        $region21: #{_lambda_.3} parent=11 // pred_check
          %p264 = pneg %p173
        $region22: #{_lambda_.3} parent=11 // pred_check_branch
          %266 = sbr.rel (%p264) target = $region24
        $region23: #{_lambda_.3} parent=11 // pred_region
          _
        $region24: #{_lambda_.3} parent=11 // pred_fallthru
          _
        // Predicated region
        $region25: #{_lambda_.3} parent=11 // pred_check
          %p267 = pneg %p194
        $region26: #{_lambda_.3} parent=11 // pred_check_branch
          %269 = sbr.rel (%p267) target = $region28
        $region27: #{_lambda_.3} parent=11 // pred_region
          _
        $region28: #{_lambda_.3} parent=11 // pred_fallthru
          _
        // Predicated region
        $region29: #{_lambda_.3} parent=11 // pred_check
          %p270 = pneg %p215
        $region30: #{_lambda_.3} parent=11 // pred_check_branch
          %272 = sbr.rel (%p270) target = $region32
        $region31: #{_lambda_.3} parent=11 // pred_region
          _
        $region32: #{_lambda_.3} parent=11 // pred_fallthru
          _
      $region12: #{_lambda_.3} parent=5 // pred_fallthru
        _
      %p273 = scmp.lt.s32.totalorder %s14, 4
      // Predicated region
      $region33: #{_lambda_.3} parent=5 // pred_check
        %p274 = pneg %p273
      $region34: #{_lambda_.3} parent=5 // pred_check_branch
        %276 = sbr.rel (%p274) target = $region36
      $region35: #{_lambda_.3} parent=5 // pred_region
        // Predicated region
        $region37: #{_lambda_.3} parent=35 // pred_check
          %p277 = pneg %p48
        $region38: #{_lambda_.3} parent=35 // pred_check_branch
          %279 = sbr.rel (%p277) target = $region40
        $region39: #{_lambda_.3} parent=35 // pred_region
          %s280 = sand.u32 %s38, 1
          %s281 = sand.u32 %s38, 1
          %s282 = smul.addr %s281, 72
          %s283 = scalar_lea.vmem [#allocation2], %s282
          %s284 = smul.addr %s21, 36
          %s285 = sadd.s32 %s22, %s284
          %s286 = smul.addr %s285, 4
          %s287 = scalar_lea.vmem %s0, %s286
          // Predicated region
          $region41: #{_lambda_.3} parent=39 // pred_check
            _
          $region42: #{_lambda_.3} parent=39 // pred_check_branch
            %289 = sbr.rel (0) target = $region44
          $region43: #{_lambda_.3} parent=39 // pred_region
            // Predicated region
            $region45: #{_lambda_.3} parent=43 // pred_check
              _
            $region46: #{_lambda_.3} parent=43 // pred_check_branch
              %291 = sbr.rel target = $region48
            $region47: #{_lambda_.3} parent=43 // pred_region
              // Predicated region
              $region60: #{_lambda_.3} parent=47 // pred_check
                _
              $region61: #{_lambda_.3} parent=47 // pred_check_branch
                %340 = sbr.rel (0) target = $region63
              $region62: #{_lambda_.3} parent=47 // pred_region
                loop: start=0, step=1, limit=1
                $region64: #{_lambda_.3} parent=62 // loop_pre_header
                  _
                $region65: #{_lambda_.3} parent=62 // loop_header
                  %s342 = sphi 0, %s346
                  %p343 = scmp.ge.s32.totalorder %s342, 1
                  %s347 = sphi %s287, %s287
                  %s348 = sphi %s283, %s283
                $region66: #{_lambda_.3} parent=62 // loop_header_branch
                  %345 = sbr.rel (%p343) target = $region70
                $region67: #{_lambda_.3} parent=62 // loop_body
                  _
                $region68: #{_lambda_.3} parent=62 // loop_footer
                  %s346 = sadd.s32 1, %s342
                $region69: #{_lambda_.3} parent=62 // loop_footer_branch
                  %341 = sbr.rel target = $region65
                $region70: #{_lambda_.3} parent=62 // loop_exit
                  _
                loop: start=0, step=1, limit=1
                $region71: #{_lambda_.3} parent=62 // loop_pre_header
                  _
                $region72: #{_lambda_.3} parent=62 // loop_header
                  %s351 = sphi 0, %s355
                  %p352 = scmp.ge.s32.totalorder %s351, 1
                  %s356 = sphi %s287, %s287
                  %s357 = sphi %s283, %s283
                $region73: #{_lambda_.3} parent=62 // loop_header_branch
                  %354 = sbr.rel (%p352) target = $region77
                $region74: #{_lambda_.3} parent=62 // loop_body
                  %v358 = vld [vmem:[%s356] sm:$0xf]
                  %359 = vst [vmem:[%s357] sm:$0xf] %v358
                  %v360 = vld [vmem:[%s356 + $0x8] sm:$0xf]
                  %361 = vst [vmem:[%s357 + $0x4] sm:$0xf] %v360
                  %v362 = vld [vmem:[%s356 + $0x10] sm:$0xf]
                  %363 = vst [vmem:[%s357 + $0x8] sm:$0xf] %v362
                  %v364 = vld [vmem:[%s356 + $0x18] sm:$0xf]
                  %365 = vst [vmem:[%s357 + $0xc] sm:$0xf] %v364
                  %v366 = vld [vmem:[%s356 + $0x20] sm:$0xf]
                  %367 = vst [vmem:[%s357 + $0x10] sm:$0xf] %v366
                  %v368 = vld [vmem:[%s356 + $0x28] sm:$0xf]
                  %369 = vst [vmem:[%s357 + $0x14] sm:$0xf] %v368
                  %v370 = vld [vmem:[%s356 + $0x30] sm:$0xf]
                  %371 = vst [vmem:[%s357 + $0x18] sm:$0xf] %v370
                  %v372 = vld [vmem:[%s356 + $0x38] sm:$0xf]
                  %373 = vst [vmem:[%s357 + $0x1c] sm:$0xf] %v372
                  %v374 = vld [vmem:[%s356 + $0x40] sm:$0xf]
                  %375 = vst [vmem:[%s357 + $0x20] sm:$0xf] %v374
                  %v376 = vld [vmem:[%s356 + $0x48] sm:$0xf]
                  %377 = vst [vmem:[%s357 + $0x24] sm:$0xf] %v376
                  %v378 = vld [vmem:[%s356 + $0x50] sm:$0xf]
                  %379 = vst [vmem:[%s357 + $0x28] sm:$0xf] %v378
                  %v380 = vld [vmem:[%s356 + $0x58] sm:$0xf]
                  %381 = vst [vmem:[%s357 + $0x2c] sm:$0xf] %v380
                  %v382 = vld [vmem:[%s356 + $0x60] sm:$0xf]
                  %383 = vst [vmem:[%s357 + $0x30] sm:$0xf] %v382
                  %v384 = vld [vmem:[%s356 + $0x68] sm:$0xf]
                  %385 = vst [vmem:[%s357 + $0x34] sm:$0xf] %v384
                  %v386 = vld [vmem:[%s356 + $0x70] sm:$0xf]
                  %387 = vst [vmem:[%s357 + $0x38] sm:$0xf] %v386
                  %v388 = vld [vmem:[%s356 + $0x78] sm:$0xf]
                  %389 = vst [vmem:[%s357 + $0x3c] sm:$0xf] %v388
                  %v390 = vld [vmem:[%s356 + $0x80] sm:$0xf]
                  %391 = vst [vmem:[%s357 + $0x40] sm:$0xf] %v390
                  %v392 = vld [vmem:[%s356 + $0x88] sm:$0xf]
                  %393 = vst [vmem:[%s357 + $0x44] sm:$0xf] %v392
                $region75: #{_lambda_.3} parent=62 // loop_footer
                  %s355 = sadd.s32 1, %s351
                $region76: #{_lambda_.3} parent=62 // loop_footer_branch
                  %350 = sbr.rel target = $region72
                $region77: #{_lambda_.3} parent=62 // loop_exit
                  _
              $region63: #{_lambda_.3} parent=47 // pred_fallthru
                _
            $region48: #{_lambda_.3} parent=43 // pred_fallthru
              _
            // Predicated region
            $region49: #{_lambda_.3} parent=43 // pred_check
              _
            $region50: #{_lambda_.3} parent=43 // pred_check_branch
              %293 = sbr.rel (0) target = $region52
            $region51: #{_lambda_.3} parent=43 // pred_region
              loop: start=0, step=1, limit=1
              $region53: #{_lambda_.3} parent=51 // loop_pre_header
                _
              $region54: #{_lambda_.3} parent=51 // loop_header
                %s296 = sphi 0, %s300
                %p297 = scmp.ge.s32.totalorder %s296, 1
                %s301 = sphi %s287, %s287
                %s302 = sphi %s283, %s283
              $region55: #{_lambda_.3} parent=51 // loop_header_branch
                %299 = sbr.rel (%p297) target = $region59
              $region56: #{_lambda_.3} parent=51 // loop_body
                %v303 = vld [vmem:[%s301] sm:$0xf]
                %304 = vst [vmem:[%s302] sm:$0xf] %v303
                %v305 = vld [vmem:[%s301 + $0x8] sm:$0xf]
                %306 = vst [vmem:[%s302 + $0x4] sm:$0xf] %v305
                %v307 = vld [vmem:[%s301 + $0x10] sm:$0xf]
                %308 = vst [vmem:[%s302 + $0x8] sm:$0xf] %v307
                %v309 = vld [vmem:[%s301 + $0x18] sm:$0xf]
                %310 = vst [vmem:[%s302 + $0xc] sm:$0xf] %v309
                %v311 = vld [vmem:[%s301 + $0x20] sm:$0xf]
                %312 = vst [vmem:[%s302 + $0x10] sm:$0xf] %v311
                %v313 = vld [vmem:[%s301 + $0x28] sm:$0xf]
                %314 = vst [vmem:[%s302 + $0x14] sm:$0xf] %v313
                %v315 = vld [vmem:[%s301 + $0x30] sm:$0xf]
                %316 = vst [vmem:[%s302 + $0x18] sm:$0xf] %v315
                %v317 = vld [vmem:[%s301 + $0x38] sm:$0xf]
                %318 = vst [vmem:[%s302 + $0x1c] sm:$0xf] %v317
                %v319 = vld [vmem:[%s301 + $0x40] sm:$0xf]
                %320 = vst [vmem:[%s302 + $0x20] sm:$0xf] %v319
                %v321 = vld [vmem:[%s301 + $0x48] sm:$0xf]
                %322 = vst [vmem:[%s302 + $0x24] sm:$0xf] %v321
                %v323 = vld [vmem:[%s301 + $0x50] sm:$0xf]
                %324 = vst [vmem:[%s302 + $0x28] sm:$0xf] %v323
                %v325 = vld [vmem:[%s301 + $0x58] sm:$0xf]
                %326 = vst [vmem:[%s302 + $0x2c] sm:$0xf] %v325
                %v327 = vld [vmem:[%s301 + $0x60] sm:$0xf]
                %328 = vst [vmem:[%s302 + $0x30] sm:$0xf] %v327
                %v329 = vld [vmem:[%s301 + $0x68] sm:$0xf]
                %330 = vst [vmem:[%s302 + $0x34] sm:$0xf] %v329
                %v331 = vld [vmem:[%s301 + $0x70] sm:$0xf]
                %332 = vst [vmem:[%s302 + $0x38] sm:$0xf] %v331
                %v333 = vld [vmem:[%s301 + $0x78] sm:$0xf]
                %334 = vst [vmem:[%s302 + $0x3c] sm:$0xf] %v333
                %v335 = vld [vmem:[%s301 + $0x80] sm:$0xf]
                %336 = vst [vmem:[%s302 + $0x40] sm:$0xf] %v335
                %v337 = vld [vmem:[%s301 + $0x88] sm:$0xf]
                %338 = vst [vmem:[%s302 + $0x44] sm:$0xf] %v337
              $region57: #{_lambda_.3} parent=51 // loop_footer
                %s300 = sadd.s32 1, %s296
              $region58: #{_lambda_.3} parent=51 // loop_footer_branch
                %295 = sbr.rel target = $region54
              $region59: #{_lambda_.3} parent=51 // loop_exit
                _
            $region52: #{_lambda_.3} parent=43 // pred_fallthru
              _
          $region44: #{_lambda_.3} parent=39 // pred_fallthru
            _
          %394 = vnop
        $region40: #{_lambda_.3} parent=35 // pred_fallthru
          _
        // Predicated region
        $region78: #{_lambda_.3} parent=35 // pred_check
          %p395 = pneg %p76
        $region79: #{_lambda_.3} parent=35 // pred_check_branch
          %397 = sbr.rel (%p395) target = $region81
        $region80: #{_lambda_.3} parent=35 // pred_region
          %s398 = sand.u32 %s66, 1
          %s399 = sand.u32 %s66, 1
          %s400 = smul.addr %s399, 16
          %s401 = scalar_lea.vmem [#allocation3], %s400
          %s402 = smul.addr %s21, 4
          %s403 = sadd.s32 %s22, %s402
          %s404 = smul.addr %s403, 8
          %s405 = scalar_lea.vmem %s1, %s404
          // Predicated region
          $region82: #{_lambda_.3} parent=80 // pred_check
            _
          $region83: #{_lambda_.3} parent=80 // pred_check_branch
            %407 = sbr.rel (0) target = $region85
          $region84: #{_lambda_.3} parent=80 // pred_region
            // Predicated region
            $region86: #{_lambda_.3} parent=84 // pred_check
              _
            $region87: #{_lambda_.3} parent=84 // pred_check_branch
              %409 = sbr.rel (0) target = $region89
            $region88: #{_lambda_.3} parent=84 // pred_region
              // Predicated region
              $region101: #{_lambda_.3} parent=88 // pred_check
                _
              $region102: #{_lambda_.3} parent=88 // pred_check_branch
                %426 = sbr.rel (0) target = $region104
              $region103: #{_lambda_.3} parent=88 // pred_region
                loop: start=0, step=1, limit=1
                $region105: #{_lambda_.3} parent=103 // loop_pre_header
                  _
                $region106: #{_lambda_.3} parent=103 // loop_header
                  %s428 = sphi 0, %s432
                  %p429 = scmp.ge.s32.totalorder %s428, 1
                  %s433 = sphi %s405, %s405
                  %s434 = sphi %s401, %s401
                $region107: #{_lambda_.3} parent=103 // loop_header_branch
                  %431 = sbr.rel (%p429) target = $region111
                $region108: #{_lambda_.3} parent=103 // loop_body
                  %v435 = vld [vmem:[%s433] sm:$0xff]
                  %436 = vst [vmem:[%s434] sm:$0xff] %v435
                  %v437 = vld [vmem:[%s433 + $0x10] sm:$0xff]
                  %438 = vst [vmem:[%s434 + $0x8] sm:$0xff] %v437
                $region109: #{_lambda_.3} parent=103 // loop_footer
                  %s432 = sadd.s32 1, %s428
                $region110: #{_lambda_.3} parent=103 // loop_footer_branch
                  %427 = sbr.rel target = $region106
                $region111: #{_lambda_.3} parent=103 // loop_exit
                  _
              $region104: #{_lambda_.3} parent=88 // pred_fallthru
                _
              // Predicated region
              $region112: #{_lambda_.3} parent=88 // pred_check
                _
              $region113: #{_lambda_.3} parent=88 // pred_check_branch
                %440 = sbr.rel target = $region115
              $region114: #{_lambda_.3} parent=88 // pred_region
                _
              $region115: #{_lambda_.3} parent=88 // pred_fallthru
                _
            $region89: #{_lambda_.3} parent=84 // pred_fallthru
              _
            // Predicated region
            $region90: #{_lambda_.3} parent=84 // pred_check
              _
            $region91: #{_lambda_.3} parent=84 // pred_check_branch
              %411 = sbr.rel target = $region93
            $region92: #{_lambda_.3} parent=84 // pred_region
              loop: start=0, step=1, limit=1
              $region94: #{_lambda_.3} parent=92 // loop_pre_header
                _
              $region95: #{_lambda_.3} parent=92 // loop_header
                %s414 = sphi 0, %s418
                %p415 = scmp.ge.s32.totalorder %s414, 1
                %s419 = sphi %s405, %s405
                %s420 = sphi %s401, %s401
              $region96: #{_lambda_.3} parent=92 // loop_header_branch
                %417 = sbr.rel (%p415) target = $region100
              $region97: #{_lambda_.3} parent=92 // loop_body
                %v421 = vld [vmem:[%s419] sm:$0xff]
                %422 = vst [vmem:[%s420] sm:$0xff] %v421
                %v423 = vld [vmem:[%s419 + $0x10] sm:$0xff]
                %424 = vst [vmem:[%s420 + $0x8] sm:$0xff] %v423
              $region98: #{_lambda_.3} parent=92 // loop_footer
                %s418 = sadd.s32 1, %s414
              $region99: #{_lambda_.3} parent=92 // loop_footer_branch
                %413 = sbr.rel target = $region95
              $region100: #{_lambda_.3} parent=92 // loop_exit
                _
            $region93: #{_lambda_.3} parent=84 // pred_fallthru
              _
          $region85: #{_lambda_.3} parent=80 // pred_fallthru
            _
          %441 = vnop
        $region81: #{_lambda_.3} parent=35 // pred_fallthru
          _
        // Predicated region
        $region116: #{_lambda_.3} parent=35 // pred_check
          %p442 = pneg %p104
        $region117: #{_lambda_.3} parent=35 // pred_check_branch
          %444 = sbr.rel (%p442) target = $region119
        $region118: #{_lambda_.3} parent=35 // pred_region
          %s445 = sand.u32 %s94, 1
          %s446 = sand.u32 %s94, 1
          %s447 = smul.addr %s446, 32
          %s448 = scalar_lea.vmem [#allocation4], %s447
          %s449 = smul.addr %s21, 16
          %s450 = sadd.s32 %s22, %s449
          %s451 = smul.addr %s450, 4
          %s452 = scalar_lea.vmem %s2, %s451
          // Predicated region
          $region120: #{_lambda_.3} parent=118 // pred_check
            _
          $region121: #{_lambda_.3} parent=118 // pred_check_branch
            %454 = sbr.rel (0) target = $region123
          $region122: #{_lambda_.3} parent=118 // pred_region
            // Predicated region
            $region124: #{_lambda_.3} parent=122 // pred_check
              _
            $region125: #{_lambda_.3} parent=122 // pred_check_branch
              %456 = sbr.rel target = $region127
            $region126: #{_lambda_.3} parent=122 // pred_region
              // Predicated region
              $region139: #{_lambda_.3} parent=126 // pred_check
                _
              $region140: #{_lambda_.3} parent=126 // pred_check_branch
                %485 = sbr.rel (0) target = $region142
              $region141: #{_lambda_.3} parent=126 // pred_region
                loop: start=0, step=1, limit=1
                $region143: #{_lambda_.3} parent=141 // loop_pre_header
                  _
                $region144: #{_lambda_.3} parent=141 // loop_header
                  %s487 = sphi 0, %s491
                  %p488 = scmp.ge.s32.totalorder %s487, 1
                  %s492 = sphi %s452, %s452
                  %s493 = sphi %s448, %s448
                $region145: #{_lambda_.3} parent=141 // loop_header_branch
                  %490 = sbr.rel (%p488) target = $region149
                $region146: #{_lambda_.3} parent=141 // loop_body
                  _
                $region147: #{_lambda_.3} parent=141 // loop_footer
                  %s491 = sadd.s32 1, %s487
                $region148: #{_lambda_.3} parent=141 // loop_footer_branch
                  %486 = sbr.rel target = $region144
                $region149: #{_lambda_.3} parent=141 // loop_exit
                  _
                loop: start=0, step=1, limit=1
                $region150: #{_lambda_.3} parent=141 // loop_pre_header
                  _
                $region151: #{_lambda_.3} parent=141 // loop_header
                  %s496 = sphi 0, %s500
                  %p497 = scmp.ge.s32.totalorder %s496, 1
                  %s501 = sphi %s452, %s452
                  %s502 = sphi %s448, %s448
                $region152: #{_lambda_.3} parent=141 // loop_header_branch
                  %499 = sbr.rel (%p497) target = $region156
                $region153: #{_lambda_.3} parent=141 // loop_body
                  %v503 = vld [vmem:[%s501] sm:$0xf]
                  %504 = vst [vmem:[%s502] sm:$0xf] %v503
                  %v505 = vld [vmem:[%s501 + $0x8] sm:$0xf]
                  %506 = vst [vmem:[%s502 + $0x4] sm:$0xf] %v505
                  %v507 = vld [vmem:[%s501 + $0x10] sm:$0xf]
                  %508 = vst [vmem:[%s502 + $0x8] sm:$0xf] %v507
                  %v509 = vld [vmem:[%s501 + $0x18] sm:$0xf]
                  %510 = vst [vmem:[%s502 + $0xc] sm:$0xf] %v509
                  %v511 = vld [vmem:[%s501 + $0x20] sm:$0xf]
                  %512 = vst [vmem:[%s502 + $0x10] sm:$0xf] %v511
                  %v513 = vld [vmem:[%s501 + $0x28] sm:$0xf]
                  %514 = vst [vmem:[%s502 + $0x14] sm:$0xf] %v513
                  %v515 = vld [vmem:[%s501 + $0x30] sm:$0xf]
                  %516 = vst [vmem:[%s502 + $0x18] sm:$0xf] %v515
                  %v517 = vld [vmem:[%s501 + $0x38] sm:$0xf]
                  %518 = vst [vmem:[%s502 + $0x1c] sm:$0xf] %v517
                $region154: #{_lambda_.3} parent=141 // loop_footer
                  %s500 = sadd.s32 1, %s496
                $region155: #{_lambda_.3} parent=141 // loop_footer_branch
                  %495 = sbr.rel target = $region151
                $region156: #{_lambda_.3} parent=141 // loop_exit
                  _
              $region142: #{_lambda_.3} parent=126 // pred_fallthru
                _
            $region127: #{_lambda_.3} parent=122 // pred_fallthru
              _
            // Predicated region
            $region128: #{_lambda_.3} parent=122 // pred_check
              _
            $region129: #{_lambda_.3} parent=122 // pred_check_branch
              %458 = sbr.rel (0) target = $region131
            $region130: #{_lambda_.3} parent=122 // pred_region
              loop: start=0, step=1, limit=1
              $region132: #{_lambda_.3} parent=130 // loop_pre_header
                _
              $region133: #{_lambda_.3} parent=130 // loop_header
                %s461 = sphi 0, %s465
                %p462 = scmp.ge.s32.totalorder %s461, 1
                %s466 = sphi %s452, %s452
                %s467 = sphi %s448, %s448
              $region134: #{_lambda_.3} parent=130 // loop_header_branch
                %464 = sbr.rel (%p462) target = $region138
              $region135: #{_lambda_.3} parent=130 // loop_body
                %v468 = vld [vmem:[%s466] sm:$0xf]
                %469 = vst [vmem:[%s467] sm:$0xf] %v468
                %v470 = vld [vmem:[%s466 + $0x8] sm:$0xf]
                %471 = vst [vmem:[%s467 + $0x4] sm:$0xf] %v470
                %v472 = vld [vmem:[%s466 + $0x10] sm:$0xf]
                %473 = vst [vmem:[%s467 + $0x8] sm:$0xf] %v472
                %v474 = vld [vmem:[%s466 + $0x18] sm:$0xf]
                %475 = vst [vmem:[%s467 + $0xc] sm:$0xf] %v474
                %v476 = vld [vmem:[%s466 + $0x20] sm:$0xf]
                %477 = vst [vmem:[%s467 + $0x10] sm:$0xf] %v476
                %v478 = vld [vmem:[%s466 + $0x28] sm:$0xf]
                %479 = vst [vmem:[%s467 + $0x14] sm:$0xf] %v478
                %v480 = vld [vmem:[%s466 + $0x30] sm:$0xf]
                %481 = vst [vmem:[%s467 + $0x18] sm:$0xf] %v480
                %v482 = vld [vmem:[%s466 + $0x38] sm:$0xf]
                %483 = vst [vmem:[%s467 + $0x1c] sm:$0xf] %v482
              $region136: #{_lambda_.3} parent=130 // loop_footer
                %s465 = sadd.s32 1, %s461
              $region137: #{_lambda_.3} parent=130 // loop_footer_branch
                %460 = sbr.rel target = $region133
              $region138: #{_lambda_.3} parent=130 // loop_exit
                _
            $region131: #{_lambda_.3} parent=122 // pred_fallthru
              _
          $region123: #{_lambda_.3} parent=118 // pred_fallthru
            _
          %519 = vnop
        $region119: #{_lambda_.3} parent=35 // pred_fallthru
          _
      $region36: #{_lambda_.3} parent=5 // pred_fallthru
        _
      %p520 = scmp.le.s32.totalorder 1, %s14
      %p521 = scmp.lt.s32.totalorder %s14, 5
      %p522 = pnand %p520, %p521
      %p523 = pneg %p522
      // Predicated region
      $region157: #{_lambda_.3} parent=5 // pred_check
        _
      $region158: #{_lambda_.3} parent=5 // pred_check_branch
        %525 = sbr.rel (%p522) target = $region160
      $region159: #{_lambda_.3} parent=5 // pred_region
        %s526 = ssub.s32 %s14, 1
        %s527 = sand.u32 %s41, 1
        %s528 = sand.u32 %s41, 1
        %s529 = smul.addr %s528, 72
        %s530 = scalar_lea.vmem [#allocation2], %s529
        // Predicated region
        $region161: #{_lambda_.3} parent=159 // pred_check
          %p531 = pneg %p54
        $region162: #{_lambda_.3} parent=159 // pred_check_branch
          %533 = sbr.rel (%p531) target = $region164
        $region163: #{_lambda_.3} parent=159 // pred_region
          _
        $region164: #{_lambda_.3} parent=159 // pred_fallthru
          _
        %s534 = sand.u32 %s69, 1
        %s535 = sand.u32 %s69, 1
        %s536 = smul.addr %s535, 16
        %s537 = scalar_lea.vmem [#allocation3], %s536
        // Predicated region
        $region165: #{_lambda_.3} parent=159 // pred_check
          %p538 = pneg %p82
        $region166: #{_lambda_.3} parent=159 // pred_check_branch
          %540 = sbr.rel (%p538) target = $region168
        $region167: #{_lambda_.3} parent=159 // pred_region
          _
        $region168: #{_lambda_.3} parent=159 // pred_fallthru
          _
        %s541 = sand.u32 %s97, 1
        %s542 = sand.u32 %s97, 1
        %s543 = smul.addr %s542, 32
        %s544 = scalar_lea.vmem [#allocation4], %s543
        // Predicated region
        $region169: #{_lambda_.3} parent=159 // pred_check
          %p545 = pneg %p110
        $region170: #{_lambda_.3} parent=159 // pred_check_branch
          %547 = sbr.rel (%p545) target = $region172
        $region171: #{_lambda_.3} parent=159 // pred_region
          _
        $region172: #{_lambda_.3} parent=159 // pred_fallthru
          _
        %s548 = sand.u32 %s41, 1
        %s549 = sand.u32 %s41, 1
        %s550 = smul.addr %s549, 72
        %s551 = scalar_lea.vmem [#allocation2], %s550
        %p552 = pneg %p54
        %p553 = pneg %p51
        %s554 = sand.u32 %s69, 1
        %s555 = sand.u32 %s69, 1
        %s556 = smul.addr %s555, 16
        %s557 = scalar_lea.vmem [#allocation3], %s556
        %p558 = pneg %p82
        %p559 = pneg %p79
        %s560 = sand.u32 %s97, 1
        %s561 = sand.u32 %s97, 1
        %s562 = smul.addr %s561, 32
        %s563 = scalar_lea.vmem [#allocation4], %s562
        %p564 = pneg %p110
        %p565 = pneg %p107
        %p566 = pneg %p131
        %p567 = pneg %p128
        %p568 = pneg %p152
        %p569 = pneg %p149
        %p570 = pneg %p173
        %p571 = pneg %p170
        %p572 = pneg %p194
        %p573 = pneg %p191
        %p574 = pneg %p215
        %p575 = pneg %p212
        %p576 = pneg %p243
        %p577 = pneg %p240
        %s578 = sand.u32 %s230, 1
        %s579 = sand.u32 %s230, 1
        %s580 = smul.addr %s579, 64
        %s581 = scalar_lea.vmem [#allocation5], %s580
        %v583 = vld [vmem:[%s530] sm:$0xf]
        %v584 = vld [vmem:[%s530 + $0x4] sm:$0xf]
        %v585 = vld [vmem:[%s530 + $0x8] sm:$0xf]
        %v586 = vld [vmem:[%s530 + $0xc] sm:$0xf]
        %v587 = vld [vmem:[%s530 + $0x10] sm:$0xf]
        %v588 = vld [vmem:[%s530 + $0x14] sm:$0xf]
        %v589 = vld [vmem:[%s530 + $0x18] sm:$0xf]
        %v590 = vld [vmem:[%s530 + $0x1c] sm:$0xf]
        %v591 = vld [vmem:[%s530 + $0x20] sm:$0xf]
        %v592 = vld [vmem:[%s530 + $0x24] sm:$0xf]
        %v593 = vld [vmem:[%s530 + $0x28] sm:$0xf]
        %v594 = vld [vmem:[%s530 + $0x2c] sm:$0xf]
        %v595 = vld [vmem:[%s530 + $0x30] sm:$0xf]
        %v596 = vld [vmem:[%s530 + $0x34] sm:$0xf]
        %v597 = vld [vmem:[%s530 + $0x38] sm:$0xf]
        %v598 = vld [vmem:[%s530 + $0x3c] sm:$0xf]
        %v599 = vld [vmem:[%s530 + $0x40] sm:$0xf]
        %v600 = vld [vmem:[%s530 + $0x44] sm:$0xf]
        %v601 = vld [vmem:[%s537] sm:$0xff]
        %v602 = vld [vmem:[%s537 + $0x8] sm:$0x1]
        %v603 = vld [vmem:[%s3] sm:$0xff]
        %v604 = vld [vmem:[%s3 + $0x8] sm:$0xff]
        %v605 = vld [vmem:[%s3 + $0x10] sm:$0xff]
        %v606 = vld [vmem:[%s3 + $0x18] sm:$0xff]
        %v607 = vld [vmem:[%s3 + $0x20] sm:$0xff]
        %v608 = vld [vmem:[%s3 + $0x28] sm:$0xff]
        %v609 = vld [vmem:[%s3 + $0x30] sm:$0xff]
        %v610 = vld [vmem:[%s3 + $0x38] sm:$0xff]
        %v619 = vunpack.c.l.b16 %v603
        %v620 = vunpack.c.h.b16 %v603
        %v621 = vunpack.c.l.b16 %v604
        %v622 = vunpack.c.h.b16 %v604
        %v623 = vunpack.c.l.b16 %v605
        %v624 = vunpack.c.h.b16 %v605
        %v625 = vunpack.c.l.b16 %v606
        %v626 = vunpack.c.h.b16 %v606
        %v627 = vunpack.c.l.b16 %v607
        %v628 = vunpack.c.h.b16 %v607
        %v629 = vunpack.c.l.b16 %v608
        %v630 = vunpack.c.h.b16 %v608
        %v631 = vunpack.c.l.b16 %v609
        %v632 = vunpack.c.h.b16 %v609
        %v633 = vunpack.c.l.b16 %v610
        %v634 = vunpack.c.h.b16 %v610
        %v635 = vpack.c.b16 %v621, %v619
        %v636 = vpack.c.b16 %v622, %v620
        %v637 = vpack.c.b16 %v625, %v623
        %v638 = vpack.c.b16 %v626, %v624
        %v639 = vpack.c.b16 %v629, %v627
        %v640 = vpack.c.b16 %v630, %v628
        %v641 = vpack.c.b16 %v633, %v631
        %v642 = vpack.c.b16 %v634, %v632
        %v665 = vunpack.c.l.b16 %v583
        %v666 = vunpack.c.l.b16 %v584
        %v667 = vunpack.c.l.b16 %v585
        %v668 = vunpack.c.l.b16 %v586
        %v669 = vunpack.c.l.b16 %v587
        %v670 = vunpack.c.l.b16 %v588
        %v671 = vunpack.c.l.b16 %v589
        %v672 = vunpack.c.l.b16 %v590
        %v673 = vunpack.c.l.b16 %v591
        %v674 = vunpack.c.l.b16 %v592
        %v675 = vunpack.c.l.b16 %v593
        %v676 = vunpack.c.l.b16 %v594
        %v677 = vunpack.c.l.b16 %v595
        %v678 = vunpack.c.l.b16 %v596
        %v679 = vunpack.c.l.b16 %v597
        %v680 = vunpack.c.l.b16 %v598
        %v681 = vunpack.c.l.b16 %v599
        %v682 = vunpack.c.l.b16 %v600
        %v683 = vpack.c.b16 %v666, %v665
        %v684 = vpack.c.b16 %v668, %v667
        %v685 = vpack.c.b16 %v670, %v669
        %v686 = vpack.c.b16 %v672, %v671
        %v687 = vpack.c.b16 %v674, %v673
        %v688 = vpack.c.b16 %v676, %v675
        %v689 = vpack.c.b16 %v678, %v677
        %v690 = vpack.c.b16 %v680, %v679
        %v691 = vpack.c.b16 %v682, %v681
        %vm701 = vcmask 130048
        %v703 = vsel %vm701, %v636, 0
        %v706 = vsel %vm701, %v638, 0
        %v709 = vsel %vm701, %v640, 0
        %v712 = vsel %vm701, %v642, 0
        %714 = vmatprep.subr.bf16.mxu0 0
        %715 = vmatpush1.bf16.msra.mxu0 %v683
        %716 = vmatprep.subr.bf16.mxu0 0
        %717 = vmatpush1.bf16.msra.mxu0 %v684
        %718 = vmatprep.subr.bf16.mxu0 0
        %719 = vmatpush1.bf16.msra.mxu0 %v685
        %720 = vmatprep.subr.bf16.mxu0 0
        %721 = vmatpush1.bf16.msra.mxu0 %v686
        %722 = vmatprep.subr.bf16.mxu0 0
        %723 = vmatpush1.bf16.msra.mxu0 %v687
        %724 = vmatprep.subr.bf16.mxu0 0
        %725 = vmatpush1.bf16.msra.mxu0 %v688
        %726 = vmatprep.subr.bf16.mxu0 0
        %727 = vmatpush1.bf16.msra.mxu0 %v689
        %728 = vmatprep.subr.bf16.mxu0 0
        %729 = vmatpush1.bf16.msra.mxu0 %v690
        %730 = vmatprep.subr.bf16.mxu0 0
        %731 = vmatpush1.bf16.msra.mxu0 %v691
        %732 = vmatprep.subr.bf16.mxu0 0
        %733 = vmatpush1.bf16.msra.mxu0 0
        %734 = vmatprep.subr.bf16.mxu0 0
        %735 = vmatpush1.bf16.msra.mxu0 0
        %736 = vmatprep.subr.bf16.mxu0 0
        %737 = vmatpush1.bf16.msra.mxu0 0
        %738 = vmatprep.subr.bf16.mxu0 0
        %739 = vmatpush1.bf16.msra.mxu0 0
        %740 = vmatprep.subr.bf16.mxu0 0
        %741 = vmatpush1.bf16.msra.mxu0 0
        %742 = vmatprep.subr.bf16.mxu0 0
        %743 = vmatpush1.bf16.msra.mxu0 0
        %744 = vmatprep.subr.bf16.mxu0 0
        %745 = vmatpush1.bf16.msra.mxu0 0
        %746 = vmatprep.mubr.bf16.mxu0 %v703
        %747 = vmatmul.mubr.bf16.gmra.mrb[0].mxu0 %v635
        %v748 = vpop.f32.mrb[0].mxu0
        %v749 = vadd.f32 0.0, %v748
        %v750 = vpop.f32.mrb[0].mxu0
        %v751 = vpop.f32.mrb[0].mxu0
        %v752 = vadd.f32 0.0, %v751
        %v753 = vpop.f32.mrb[0].mxu0
        %754 = vmatprep.mubr.bf16.mxu0 %v706
        %755 = vmatmul.mubr.bf16.gmra.mrb[0].mxu0 %v637
        %v756 = vpop.f32.mrb[0].mxu0
        %v757 = vadd.f32 0.0, %v756
        %v758 = vpop.f32.mrb[0].mxu0
        %v759 = vpop.f32.mrb[0].mxu0
        %v760 = vadd.f32 0.0, %v759
        %v761 = vpop.f32.mrb[0].mxu0
        %762 = vmatprep.mubr.bf16.mxu0 %v709
        %763 = vmatmul.mubr.bf16.gmra.mrb[0].mxu0 %v639
        %v764 = vpop.f32.mrb[0].mxu0
        %v765 = vadd.f32 0.0, %v764
        %v766 = vpop.f32.mrb[0].mxu0
        %v767 = vpop.f32.mrb[0].mxu0
        %v768 = vadd.f32 0.0, %v767
        %v769 = vpop.f32.mrb[0].mxu0
        %770 = vmatprep.mubr.bf16.mxu0 %v712
        %771 = vmatmul.mubr.bf16.gmra.mrb[0].mxu0 %v641
        %v772 = vpop.f32.mrb[0].mxu0
        %v773 = vadd.f32 0.0, %v772
        %v774 = vpop.f32.mrb[0].mxu0
        %v775 = vpop.f32.mrb[0].mxu0
        %v776 = vadd.f32 0.0, %v775
        %v777 = vpop.f32.mrb[0].mxu0
        %778 = vdwg.mxu0
        %v779 = vunpack.c.l.bf16 %v583
        %v780 = vunpack.c.l.bf16 %v584
        %v781 = vlaneseq
        %v782 = vshrl.u32 %v781, 7
        %v783 = vsub.s32 0, %v782
        %v784 = vrot.slane %v601, %v783
        %v785 = vmul.f32 %v779, %v784
        %v786 = vmul.f32 %v780, %v784
        %v787 = vpack.c.bf16 %v786, %v785
        %v788 = vunpack.c.l.bf16 %v585
        %v789 = vunpack.c.l.bf16 %v586
        %v790 = vlaneseq
        %v791 = vshrl.u32 %v790, 7
        %v792 = vsub.s32 1, %v791
        %v793 = vrot.slane %v601, %v792
        %v794 = vmul.f32 %v788, %v793
        %v795 = vmul.f32 %v789, %v793
        %v796 = vpack.c.bf16 %v795, %v794
        %v797 = vunpack.c.l.bf16 %v587
        %v798 = vunpack.c.l.bf16 %v588
        %v799 = vlaneseq
        %v800 = vshrl.u32 %v799, 7
        %v801 = vsub.s32 2, %v800
        %v802 = vrot.slane %v601, %v801
        %v803 = vmul.f32 %v797, %v802
        %v804 = vmul.f32 %v798, %v802
        %v805 = vpack.c.bf16 %v804, %v803
        %v806 = vunpack.c.l.bf16 %v589
        %v807 = vunpack.c.l.bf16 %v590
        %v808 = vlaneseq
        %v809 = vshrl.u32 %v808, 7
        %v810 = vsub.s32 3, %v809
        %v811 = vrot.slane %v601, %v810
        %v812 = vmul.f32 %v806, %v811
        %v813 = vmul.f32 %v807, %v811
        %v814 = vpack.c.bf16 %v813, %v812
        %v815 = vunpack.c.l.bf16 %v591
        %v816 = vunpack.c.l.bf16 %v592
        %v817 = vlaneseq
        %v818 = vshrl.u32 %v817, 7
        %v819 = vsub.s32 4, %v818
        %v820 = vrot.slane %v601, %v819
        %v821 = vmul.f32 %v815, %v820
        %v822 = vmul.f32 %v816, %v820
        %v823 = vpack.c.bf16 %v822, %v821
        %v824 = vunpack.c.l.bf16 %v593
        %v825 = vunpack.c.l.bf16 %v594
        %v826 = vlaneseq
        %v827 = vshrl.u32 %v826, 7
        %v828 = vsub.s32 5, %v827
        %v829 = vrot.slane %v601, %v828
        %v830 = vmul.f32 %v824, %v829
        %v831 = vmul.f32 %v825, %v829
        %v832 = vpack.c.bf16 %v831, %v830
        %v833 = vunpack.c.l.bf16 %v595
        %v834 = vunpack.c.l.bf16 %v596
        %v835 = vlaneseq
        %v836 = vshrl.u32 %v835, 7
        %v837 = vsub.s32 6, %v836
        %v838 = vrot.slane %v601, %v837
        %v839 = vmul.f32 %v833, %v838
        %v840 = vmul.f32 %v834, %v838
        %v841 = vpack.c.bf16 %v840, %v839
        %v842 = vunpack.c.l.bf16 %v597
        %v843 = vunpack.c.l.bf16 %v598
        %v844 = vlaneseq
        %v845 = vshrl.u32 %v844, 7
        %v846 = vsub.s32 7, %v845
        %v847 = vrot.slane %v601, %v846
        %v848 = vmul.f32 %v842, %v847
        %v849 = vmul.f32 %v843, %v847
        %v850 = vpack.c.bf16 %v849, %v848
        %v851 = vunpack.c.l.bf16 %v599
        %v852 = vunpack.c.l.bf16 %v600
        %v853 = vlaneseq
        %v854 = vshrl.u32 %v853, 7
        %v855 = vsub.s32 0, %v854
        %v856 = vrot.slane %v602, %v855
        %v857 = vmul.f32 %v851, %v856
        %v858 = vmul.f32 %v852, %v856
        %v859 = vpack.c.bf16 %v858, %v857
        %860 = vmatprep.subr.bf16.mxu0 0
        %861 = vmatpush1.bf16.msra.mxu0 %v787
        %862 = vmatprep.subr.bf16.mxu0 0
        %863 = vmatpush1.bf16.msra.mxu0 %v796
        %864 = vmatprep.subr.bf16.mxu0 0
        %865 = vmatpush1.bf16.msra.mxu0 %v805
        %866 = vmatprep.subr.bf16.mxu0 0
        %867 = vmatpush1.bf16.msra.mxu0 %v814
        %868 = vmatprep.subr.bf16.mxu0 0
        %869 = vmatpush1.bf16.msra.mxu0 %v823
        %870 = vmatprep.subr.bf16.mxu0 0
        %871 = vmatpush1.bf16.msra.mxu0 %v832
        %872 = vmatprep.subr.bf16.mxu0 0
        %873 = vmatpush1.bf16.msra.mxu0 %v841
        %874 = vmatprep.subr.bf16.mxu0 0
        %875 = vmatpush1.bf16.msra.mxu0 %v850
        %876 = vmatprep.subr.bf16.mxu0 0
        %877 = vmatpush1.bf16.msra.mxu0 %v859
        %878 = vmatprep.subr.bf16.mxu0 0
        %879 = vmatpush1.bf16.msra.mxu0 0
        %880 = vmatprep.subr.bf16.mxu0 0
        %881 = vmatpush1.bf16.msra.mxu0 0
        %882 = vmatprep.subr.bf16.mxu0 0
        %883 = vmatpush1.bf16.msra.mxu0 0
        %884 = vmatprep.subr.bf16.mxu0 0
        %885 = vmatpush1.bf16.msra.mxu0 0
        %886 = vmatprep.subr.bf16.mxu0 0
        %887 = vmatpush1.bf16.msra.mxu0 0
        %888 = vmatprep.subr.bf16.mxu0 0
        %889 = vmatpush1.bf16.msra.mxu0 0
        %890 = vmatprep.subr.bf16.mxu0 0
        %891 = vmatpush1.bf16.msra.mxu0 0
        %892 = vmatprep.mubr.bf16.mxu0 %v703
        %893 = vmatmul.mubr.bf16.gmra.mrb[0].mxu0 %v635
        %v894 = vpop.f32.mrb[0].mxu0
        %v895 = vadd.f32 0.0, %v894
        %v896 = vpop.f32.mrb[0].mxu0
        %v897 = vpop.f32.mrb[0].mxu0
        %v898 = vadd.f32 0.0, %v897
        %v899 = vpop.f32.mrb[0].mxu0
        %900 = vmatprep.mubr.bf16.mxu0 %v706
        %901 = vmatmul.mubr.bf16.gmra.mrb[0].mxu0 %v637
        %v902 = vpop.f32.mrb[0].mxu0
        %v903 = vadd.f32 0.0, %v902
        %v904 = vpop.f32.mrb[0].mxu0
        %v905 = vpop.f32.mrb[0].mxu0
        %v906 = vadd.f32 0.0, %v905
        %v907 = vpop.f32.mrb[0].mxu0
        %908 = vmatprep.mubr.bf16.mxu0 %v709
        %909 = vmatmul.mubr.bf16.gmra.mrb[0].mxu0 %v639
        %v910 = vpop.f32.mrb[0].mxu0
        %v911 = vadd.f32 0.0, %v910
        %v912 = vpop.f32.mrb[0].mxu0
        %v913 = vpop.f32.mrb[0].mxu0
        %v914 = vadd.f32 0.0, %v913
        %v915 = vpop.f32.mrb[0].mxu0
        %916 = vmatprep.mubr.bf16.mxu0 %v712
        %917 = vmatmul.mubr.bf16.gmra.mrb[0].mxu0 %v641
        %v918 = vpop.f32.mrb[0].mxu0
        %v919 = vadd.f32 0.0, %v918
        %v920 = vpop.f32.mrb[0].mxu0
        %v921 = vpop.f32.mrb[0].mxu0
        %v922 = vadd.f32 0.0, %v921
        %v923 = vpop.f32.mrb[0].mxu0
        %924 = vdwg.mxu0
        %v925 = vld [vmem:[%s4] sm:$0xff]
        %v926 = vld [vmem:[%s4 + $0x8] sm:$0xff]
        %v927 = vld [vmem:[%s4 + $0x10] sm:$0xff]
        %v928 = vld [vmem:[%s4 + $0x18] sm:$0xff]
        %v929 = vld [vmem:[%s4 + $0x20] sm:$0xff]
        %v930 = vld [vmem:[%s4 + $0x28] sm:$0xff]
        %v931 = vld [vmem:[%s4 + $0x30] sm:$0xff]
        %v932 = vld [vmem:[%s4 + $0x38] sm:$0xff]
        %934 = vset.pattern.permute.xlu0 0
        %935 = vperm.xlu0 %934, %v925
        %v936 = vpop.permute.xlu0 %935
        %939 = vset.pattern.permute.xlu0 0
        %940 = vperm.xlu0 %939, %v926
        %v941 = vpop.permute.xlu0 %940
        %944 = vset.pattern.permute.xlu0 0
        %945 = vperm.xlu0 %944, %v927
        %v946 = vpop.permute.xlu0 %945
        %949 = vset.pattern.permute.xlu0 0
        %950 = vperm.xlu0 %949, %v928
        %v951 = vpop.permute.xlu0 %950
        %954 = vset.pattern.permute.xlu0 0
        %955 = vperm.xlu0 %954, %v929
        %v956 = vpop.permute.xlu0 %955
        %959 = vset.pattern.permute.xlu0 0
        %960 = vperm.xlu0 %959, %v930
        %v961 = vpop.permute.xlu0 %960
        %964 = vset.pattern.permute.xlu0 0
        %965 = vperm.xlu0 %964, %v931
        %v966 = vpop.permute.xlu0 %965
        %969 = vset.pattern.permute.xlu0 0
        %970 = vperm.xlu0 %969, %v932
        %v971 = vpop.permute.xlu0 %970
        %v973 = vmul.f32 %v749, %v936
        %v974 = vmul.f32 %v752, %v941
        %v975 = vmul.f32 %v757, %v946
        %v976 = vmul.f32 %v760, %v951
        %v977 = vmul.f32 %v765, %v956
        %v978 = vmul.f32 %v768, %v961
        %v979 = vmul.f32 %v773, %v966
        %v980 = vmul.f32 %v776, %v971
        %v981 = vld [vmem:[%s5] sm:$0xff]
        %v982 = vld [vmem:[%s5 + $0x8] sm:$0xff]
        %v983 = vld [vmem:[%s5 + $0x10] sm:$0xff]
        %v984 = vld [vmem:[%s5 + $0x18] sm:$0xff]
        %v985 = vld [vmem:[%s5 + $0x20] sm:$0xff]
        %v986 = vld [vmem:[%s5 + $0x28] sm:$0xff]
        %v987 = vld [vmem:[%s5 + $0x30] sm:$0xff]
        %v988 = vld [vmem:[%s5 + $0x38] sm:$0xff]
        %990 = vset.pattern.permute.xlu0 0
        %991 = vperm.xlu0 %990, %v981
        %v992 = vpop.permute.xlu0 %991
        %995 = vset.pattern.permute.xlu0 0
        %996 = vperm.xlu0 %995, %v982
        %v997 = vpop.permute.xlu0 %996
        %1000 = vset.pattern.permute.xlu0 0
        %1001 = vperm.xlu0 %1000, %v983
        %v1002 = vpop.permute.xlu0 %1001
        %1005 = vset.pattern.permute.xlu0 0
        %1006 = vperm.xlu0 %1005, %v984
        %v1007 = vpop.permute.xlu0 %1006
        %1010 = vset.pattern.permute.xlu0 0
        %1011 = vperm.xlu0 %1010, %v985
        %v1012 = vpop.permute.xlu0 %1011
        %1015 = vset.pattern.permute.xlu0 0
        %1016 = vperm.xlu0 %1015, %v986
        %v1017 = vpop.permute.xlu0 %1016
        %1020 = vset.pattern.permute.xlu0 0
        %1021 = vperm.xlu0 %1020, %v987
        %v1022 = vpop.permute.xlu0 %1021
        %1025 = vset.pattern.permute.xlu0 0
        %1026 = vperm.xlu0 %1025, %v988
        %v1027 = vpop.permute.xlu0 %1026
        %v1029 = vadd.f32 %v973, %v992
        %v1030 = vadd.f32 %v974, %v997
        %v1031 = vadd.f32 %v975, %v1002
        %v1032 = vadd.f32 %v976, %v1007
        %v1033 = vadd.f32 %v977, %v1012
        %v1034 = vadd.f32 %v978, %v1017
        %v1035 = vadd.f32 %v979, %v1022
        %v1036 = vadd.f32 %v980, %v1027
        %vm1037 = vcmp.gt.f32.partialorder %v1029, 0.0
        %vm1038 = vcmp.gt.f32.partialorder %v1030, 0.0
        %vm1039 = vcmp.gt.f32.partialorder %v1031, 0.0
        %vm1040 = vcmp.gt.f32.partialorder %v1032, 0.0
        %vm1041 = vcmp.gt.f32.partialorder %v1033, 0.0
        %vm1042 = vcmp.gt.f32.partialorder %v1034, 0.0
        %vm1043 = vcmp.gt.f32.partialorder %v1035, 0.0
        %vm1044 = vcmp.gt.f32.partialorder %v1036, 0.0
        %v1045 = vmul.f32 %v1029, 0.01
        %v1046 = vmul.f32 %v1030, 0.01
        %v1047 = vmul.f32 %v1031, 0.01
        %v1048 = vmul.f32 %v1032, 0.01
        %v1049 = vmul.f32 %v1033, 0.01
        %v1050 = vmul.f32 %v1034, 0.01
        %v1051 = vmul.f32 %v1035, 0.01
        %v1052 = vmul.f32 %v1036, 0.01
        %v1053 = vsel %vm1037, %v1029, %v1045
        %v1054 = vsel %vm1038, %v1030, %v1046
        %v1055 = vsel %vm1039, %v1031, %v1047
        %v1056 = vsel %vm1040, %v1032, %v1048
        %v1057 = vsel %vm1041, %v1033, %v1049
        %v1058 = vsel %vm1042, %v1034, %v1050
        %v1059 = vsel %vm1043, %v1035, %v1051
        %v1060 = vsel %vm1044, %v1036, %v1052
        %v1061 = vmul.f32 %v895, %v936
        %v1062 = vmul.f32 %v898, %v941
        %v1063 = vmul.f32 %v903, %v946
        %v1064 = vmul.f32 %v906, %v951
        %v1065 = vmul.f32 %v911, %v956
        %v1066 = vmul.f32 %v914, %v961
        %v1067 = vmul.f32 %v919, %v966
        %v1068 = vmul.f32 %v922, %v971
        %v1069 = vadd.f32 %v1061, %v992
        %v1070 = vadd.f32 %v1062, %v997
        %v1071 = vadd.f32 %v1063, %v1002
        %v1072 = vadd.f32 %v1064, %v1007
        %v1073 = vadd.f32 %v1065, %v1012
        %v1074 = vadd.f32 %v1066, %v1017
        %v1075 = vadd.f32 %v1067, %v1022
        %v1076 = vadd.f32 %v1068, %v1027
        %vm1077 = vcmp.gt.f32.partialorder %v1069, 0.0
        %vm1078 = vcmp.gt.f32.partialorder %v1070, 0.0
        %vm1079 = vcmp.gt.f32.partialorder %v1071, 0.0
        %vm1080 = vcmp.gt.f32.partialorder %v1072, 0.0
        %vm1081 = vcmp.gt.f32.partialorder %v1073, 0.0
        %vm1082 = vcmp.gt.f32.partialorder %v1074, 0.0
        %vm1083 = vcmp.gt.f32.partialorder %v1075, 0.0
        %vm1084 = vcmp.gt.f32.partialorder %v1076, 0.0
        %v1085 = vmul.f32 %v1069, 0.01
        %v1086 = vmul.f32 %v1070, 0.01
        %v1087 = vmul.f32 %v1071, 0.01
        %v1088 = vmul.f32 %v1072, 0.01
        %v1089 = vmul.f32 %v1073, 0.01
        %v1090 = vmul.f32 %v1074, 0.01
        %v1091 = vmul.f32 %v1075, 0.01
        %v1092 = vmul.f32 %v1076, 0.01
        %v1093 = vsel %vm1077, %v1069, %v1085
        %v1094 = vsel %vm1078, %v1070, %v1086
        %v1095 = vsel %vm1079, %v1071, %v1087
        %v1096 = vsel %vm1080, %v1072, %v1088
        %v1097 = vsel %vm1081, %v1073, %v1089
        %v1098 = vsel %vm1082, %v1074, %v1090
        %v1099 = vsel %vm1083, %v1075, %v1091
        %v1100 = vsel %vm1084, %v1076, %v1092
        %v1101 = vmul.f32 %v1053, %v820
        %v1102 = vmul.f32 %v1054, %v820
        %v1103 = vmul.f32 %v1055, %v820
        %v1104 = vmul.f32 %v1056, %v820
        %v1105 = vmul.f32 %v1057, %v820
        %v1106 = vmul.f32 %v1058, %v820
        %v1107 = vmul.f32 %v1059, %v820
        %v1108 = vmul.f32 %v1060, %v820
        %v1109 = vsub.f32 %v1101, %v1093
        %v1110 = vsub.f32 %v1102, %v1094
        %v1111 = vsub.f32 %v1103, %v1095
        %v1112 = vsub.f32 %v1104, %v1096
        %v1113 = vsub.f32 %v1105, %v1097
        %v1114 = vsub.f32 %v1106, %v1098
        %v1115 = vsub.f32 %v1107, %v1099
        %v1116 = vsub.f32 %v1108, %v1100
        %v1117 = vand.u32 2147483647, %v1109
        %v1118 = vand.u32 2147483647, %v1110
        %v1119 = vand.u32 2147483647, %v1111
        %v1120 = vand.u32 2147483647, %v1112
        %v1121 = vand.u32 2147483647, %v1113
        %v1122 = vand.u32 2147483647, %v1114
        %v1123 = vand.u32 2147483647, %v1115
        %v1124 = vand.u32 2147483647, %v1116
        %v1125 = vsub.f32 %v1053, %v1117
        %v1126 = vsub.f32 %v1054, %v1118
        %v1127 = vsub.f32 %v1055, %v1119
        %v1128 = vsub.f32 %v1056, %v1120
        %v1129 = vsub.f32 %v1057, %v1121
        %v1130 = vsub.f32 %v1058, %v1122
        %v1131 = vsub.f32 %v1059, %v1123
        %v1132 = vsub.f32 %v1060, %v1124
        %v1133 = vld [vmem:[%s6] sm:$0xff]
        %v1134 = vld [vmem:[%s6 + $0x8] sm:$0xff]
        %v1135 = vld [vmem:[%s6 + $0x10] sm:$0xff]
        %v1136 = vld [vmem:[%s6 + $0x18] sm:$0xff]
        %v1137 = vld [vmem:[%s6 + $0x20] sm:$0xff]
        %v1138 = vld [vmem:[%s6 + $0x28] sm:$0xff]
        %v1139 = vld [vmem:[%s6 + $0x30] sm:$0xff]
        %v1140 = vld [vmem:[%s6 + $0x38] sm:$0xff]
        %1142 = vset.pattern.permute.xlu0 0
        %1143 = vperm.xlu0 %1142, %v1133
        %v1144 = vpop.permute.xlu0 %1143
        %1147 = vset.pattern.permute.xlu0 0
        %1148 = vperm.xlu0 %1147, %v1134
        %v1149 = vpop.permute.xlu0 %1148
        %1152 = vset.pattern.permute.xlu0 0
        %1153 = vperm.xlu0 %1152, %v1135
        %v1154 = vpop.permute.xlu0 %1153
        %1157 = vset.pattern.permute.xlu0 0
        %1158 = vperm.xlu0 %1157, %v1136
        %v1159 = vpop.permute.xlu0 %1158
        %1162 = vset.pattern.permute.xlu0 0
        %1163 = vperm.xlu0 %1162, %v1137
        %v1164 = vpop.permute.xlu0 %1163
        %1167 = vset.pattern.permute.xlu0 0
        %1168 = vperm.xlu0 %1167, %v1138
        %v1169 = vpop.permute.xlu0 %1168
        %1172 = vset.pattern.permute.xlu0 0
        %1173 = vperm.xlu0 %1172, %v1139
        %v1174 = vpop.permute.xlu0 %1173
        %1177 = vset.pattern.permute.xlu0 0
        %1178 = vperm.xlu0 %1177, %v1140
        %v1179 = vpop.permute.xlu0 %1178
        %v1181 = vmul.f32 %v1125, %v1144
        %v1182 = vmul.f32 %v1126, %v1149
        %v1183 = vmul.f32 %v1127, %v1154
        %v1184 = vmul.f32 %v1128, %v1159
        %v1185 = vmul.f32 %v1129, %v1164
        %v1186 = vmul.f32 %v1130, %v1169
        %v1187 = vmul.f32 %v1131, %v1174
        %v1188 = vmul.f32 %v1132, %v1179
        %v1189 = vld [vmem:[%s7] sm:$0xff]
        %v1190 = vld [vmem:[%s7 + $0x8] sm:$0xff]
        %v1191 = vld [vmem:[%s7 + $0x10] sm:$0xff]
        %v1192 = vld [vmem:[%s7 + $0x18] sm:$0xff]
        %v1193 = vld [vmem:[%s7 + $0x20] sm:$0xff]
        %v1194 = vld [vmem:[%s7 + $0x28] sm:$0xff]
        %v1195 = vld [vmem:[%s7 + $0x30] sm:$0xff]
        %v1196 = vld [vmem:[%s7 + $0x38] sm:$0xff]
        %1198 = vset.pattern.permute.xlu0 0
        %1199 = vperm.xlu0 %1198, %v1189
        %v1200 = vpop.permute.xlu0 %1199
        %1203 = vset.pattern.permute.xlu0 0
        %1204 = vperm.xlu0 %1203, %v1190
        %v1205 = vpop.permute.xlu0 %1204
        %1208 = vset.pattern.permute.xlu0 0
        %1209 = vperm.xlu0 %1208, %v1191
        %v1210 = vpop.permute.xlu0 %1209
        %1213 = vset.pattern.permute.xlu0 0
        %1214 = vperm.xlu0 %1213, %v1192
        %v1215 = vpop.permute.xlu0 %1214
        %1218 = vset.pattern.permute.xlu0 0
        %1219 = vperm.xlu0 %1218, %v1193
        %v1220 = vpop.permute.xlu0 %1219
        %1223 = vset.pattern.permute.xlu0 0
        %1224 = vperm.xlu0 %1223, %v1194
        %v1225 = vpop.permute.xlu0 %1224
        %1228 = vset.pattern.permute.xlu0 0
        %1229 = vperm.xlu0 %1228, %v1195
        %v1230 = vpop.permute.xlu0 %1229
        %1233 = vset.pattern.permute.xlu0 0
        %1234 = vperm.xlu0 %1233, %v1196
        %v1235 = vpop.permute.xlu0 %1234
        %v1237 = vadd.f32 %v1181, %v1200
        %v1238 = vadd.f32 %v1182, %v1205
        %v1239 = vadd.f32 %v1183, %v1210
        %v1240 = vadd.f32 %v1184, %v1215
        %v1241 = vadd.f32 %v1185, %v1220
        %v1242 = vadd.f32 %v1186, %v1225
        %v1243 = vadd.f32 %v1187, %v1230
        %v1244 = vadd.f32 %v1188, %v1235
        %v1245 = vmax.f32 %v1237, 0.0
        %v1246 = vmax.f32 %v1238, 0.0
        %v1247 = vmax.f32 %v1239, 0.0
        %v1248 = vmax.f32 %v1240, 0.0
        %v1249 = vmax.f32 %v1241, 0.0
        %v1250 = vmax.f32 %v1242, 0.0
        %v1251 = vmax.f32 %v1243, 0.0
        %v1252 = vmax.f32 %v1244, 0.0
        %v1253 = vld [vmem:[%s544] sm:$0xf]
        %v1254 = vld [vmem:[%s544 + $0x4] sm:$0xf]
        %v1255 = vld [vmem:[%s544 + $0x8] sm:$0xf]
        %v1256 = vld [vmem:[%s544 + $0xc] sm:$0xf]
        %v1257 = vld [vmem:[%s544 + $0x10] sm:$0xf]
        %v1258 = vld [vmem:[%s544 + $0x14] sm:$0xf]
        %v1259 = vld [vmem:[%s544 + $0x18] sm:$0xf]
        %v1260 = vld [vmem:[%s544 + $0x1c] sm:$0xf]
        %v1261 = vpack.c.bf16 %v1246, %v1245
        %v1262 = vpack.c.bf16 %v1248, %v1247
        %v1263 = vpack.c.bf16 %v1250, %v1249
        %v1264 = vpack.c.bf16 %v1252, %v1251
        %v1273 = vunpack.c.l.b16 %v1253
        %v1274 = vunpack.c.l.b16 %v1254
        %v1275 = vunpack.c.l.b16 %v1255
        %v1276 = vunpack.c.l.b16 %v1256
        %v1277 = vunpack.c.l.b16 %v1257
        %v1278 = vunpack.c.l.b16 %v1258
        %v1279 = vunpack.c.l.b16 %v1259
        %v1280 = vunpack.c.l.b16 %v1260
        %v1285 = vunpack.c.l.b16 %v1261
        %v1286 = vunpack.c.h.b16 %v1261
        %v1287 = vunpack.c.l.b16 %v1262
        %v1288 = vunpack.c.h.b16 %v1262
        %v1289 = vunpack.c.l.b16 %v1263
        %v1290 = vunpack.c.h.b16 %v1263
        %v1291 = vunpack.c.l.b16 %v1264
        %v1292 = vunpack.c.h.b16 %v1264
        %v1293 = vpack.c.b16 %v1273, %v1273
        %v1294 = vpack.c.b16 %v1274, %v1274
        %v1295 = vpack.c.b16 %v1275, %v1275
        %v1296 = vpack.c.b16 %v1276, %v1276
        %v1297 = vpack.c.b16 %v1277, %v1277
        %v1298 = vpack.c.b16 %v1278, %v1278
        %v1299 = vpack.c.b16 %v1279, %v1279
        %v1300 = vpack.c.b16 %v1280, %v1280
        %v1301 = vpack.c.b16 %v1285, %v1285
        %v1302 = vpack.c.b16 %v1286, %v1286
        %v1303 = vpack.c.b16 %v1287, %v1287
        %v1304 = vpack.c.b16 %v1288, %v1288
        %v1305 = vpack.c.b16 %v1289, %v1289
        %v1306 = vpack.c.b16 %v1290, %v1290
        %v1307 = vpack.c.b16 %v1291, %v1291
        %v1308 = vpack.c.b16 %v1292, %v1292
        %1325 = vst [vmem:[%s581] sm:$0xf] %v1293
        %1326 = vst [vmem:[%s581 + $0x4] sm:$0xf] %v1294
        %1327 = vst [vmem:[%s581 + $0x8] sm:$0xf] %v1295
        %1328 = vst [vmem:[%s581 + $0xc] sm:$0xf] %v1296
        %1329 = vst [vmem:[%s581 + $0x10] sm:$0xf] %v1297
        %1330 = vst [vmem:[%s581 + $0x14] sm:$0xf] %v1298
        %1331 = vst [vmem:[%s581 + $0x18] sm:$0xf] %v1299
        %1332 = vst [vmem:[%s581 + $0x1c] sm:$0xf] %v1300
        %1333 = vst [vmem:[%s581 + $0x20] sm:$0xf] %v1301
        %1334 = vst [vmem:[%s581 + $0x24] sm:$0xf] %v1302
        %1335 = vst [vmem:[%s581 + $0x28] sm:$0xf] %v1303
        %1336 = vst [vmem:[%s581 + $0x2c] sm:$0xf] %v1304
        %1337 = vst [vmem:[%s581 + $0x30] sm:$0xf] %v1305
        %1338 = vst [vmem:[%s581 + $0x34] sm:$0xf] %v1306
        %1339 = vst [vmem:[%s581 + $0x38] sm:$0xf] %v1307
        %1340 = vst [vmem:[%s581 + $0x3c] sm:$0xf] %v1308
        %s1341 = sand.u32 %s230, 1
        %s1342 = sand.u32 %s230, 1
        %s1343 = smul.addr %s1342, 64
        %s1344 = scalar_lea.vmem [#allocation5], %s1343
        // Predicated region
        $region173: #{_lambda_.3} parent=159 // pred_check
          %p1345 = pneg %p240
        $region174: #{_lambda_.3} parent=159 // pred_check_branch
          %1347 = sbr.rel (%p1345) target = $region176
        $region175: #{_lambda_.3} parent=159 // pred_region
          %s1348 = smul.addr %s23, 32
          %s1349 = sadd.s32 %s24, %s1348
          %s1350 = smul.addr %s1349, 4
          %s1351 = scalar_lea.vmem %s8, %s1350
          // Predicated region
          $region177: #{_lambda_.3} parent=175 // pred_check
            _
          $region178: #{_lambda_.3} parent=175 // pred_check_branch
            %1353 = sbr.rel (0) target = $region180
          $region179: #{_lambda_.3} parent=175 // pred_region
            // Predicated region
            $region181: #{_lambda_.3} parent=179 // pred_check
              _
            $region182: #{_lambda_.3} parent=179 // pred_check_branch
              %1355 = sbr.rel target = $region184
            $region183: #{_lambda_.3} parent=179 // pred_region
              // Predicated region
              $region196: #{_lambda_.3} parent=183 // pred_check
                _
              $region197: #{_lambda_.3} parent=183 // pred_check_branch
                %1400 = sbr.rel (0) target = $region199
              $region198: #{_lambda_.3} parent=183 // pred_region
                loop: start=0, step=1, limit=1
                $region200: #{_lambda_.3} parent=198 // loop_pre_header
                  _
                $region201: #{_lambda_.3} parent=198 // loop_header
                  %s1402 = sphi 0, %s1406
                  %p1403 = scmp.ge.s32.totalorder %s1402, 1
                  %s1407 = sphi %s1344, %s1344
                  %s1408 = sphi %s1351, %s1351
                $region202: #{_lambda_.3} parent=198 // loop_header_branch
                  %1405 = sbr.rel (%p1403) target = $region206
                $region203: #{_lambda_.3} parent=198 // loop_body
                  _
                $region204: #{_lambda_.3} parent=198 // loop_footer
                  %s1406 = sadd.s32 1, %s1402
                $region205: #{_lambda_.3} parent=198 // loop_footer_branch
                  %1401 = sbr.rel target = $region201
                $region206: #{_lambda_.3} parent=198 // loop_exit
                  _
                loop: start=0, step=1, limit=1
                $region207: #{_lambda_.3} parent=198 // loop_pre_header
                  _
                $region208: #{_lambda_.3} parent=198 // loop_header
                  %s1411 = sphi 0, %s1415
                  %p1412 = scmp.ge.s32.totalorder %s1411, 1
                  %s1416 = sphi %s1344, %s1344
                  %s1417 = sphi %s1351, %s1351
                $region209: #{_lambda_.3} parent=198 // loop_header_branch
                  %1414 = sbr.rel (%p1412) target = $region213
                $region210: #{_lambda_.3} parent=198 // loop_body
                  %v1418 = vld [vmem:[%s1416] sm:$0xf]
                  %1419 = vst [vmem:[%s1417] sm:$0xf] %v1418
                  %v1420 = vld [vmem:[%s1416 + $0x4] sm:$0xf]
                  %1421 = vst [vmem:[%s1417 + $0x8] sm:$0xf] %v1420
                  %v1422 = vld [vmem:[%s1416 + $0x8] sm:$0xf]
                  %1423 = vst [vmem:[%s1417 + $0x10] sm:$0xf] %v1422
                  %v1424 = vld [vmem:[%s1416 + $0xc] sm:$0xf]
                  %1425 = vst [vmem:[%s1417 + $0x18] sm:$0xf] %v1424
                  %v1426 = vld [vmem:[%s1416 + $0x10] sm:$0xf]
                  %1427 = vst [vmem:[%s1417 + $0x20] sm:$0xf] %v1426
                  %v1428 = vld [vmem:[%s1416 + $0x14] sm:$0xf]
                  %1429 = vst [vmem:[%s1417 + $0x28] sm:$0xf] %v1428
                  %v1430 = vld [vmem:[%s1416 + $0x18] sm:$0xf]
                  %1431 = vst [vmem:[%s1417 + $0x30] sm:$0xf] %v1430
                  %v1432 = vld [vmem:[%s1416 + $0x1c] sm:$0xf]
                  %1433 = vst [vmem:[%s1417 + $0x38] sm:$0xf] %v1432
                  %v1434 = vld [vmem:[%s1416 + $0x20] sm:$0xf]
                  %1435 = vst [vmem:[%s1417 + $0x40] sm:$0xf] %v1434
                  %v1436 = vld [vmem:[%s1416 + $0x24] sm:$0xf]
                  %1437 = vst [vmem:[%s1417 + $0x48] sm:$0xf] %v1436
                  %v1438 = vld [vmem:[%s1416 + $0x28] sm:$0xf]
                  %1439 = vst [vmem:[%s1417 + $0x50] sm:$0xf] %v1438
                  %v1440 = vld [vmem:[%s1416 + $0x2c] sm:$0xf]
                  %1441 = vst [vmem:[%s1417 + $0x58] sm:$0xf] %v1440
                  %v1442 = vld [vmem:[%s1416 + $0x30] sm:$0xf]
                  %1443 = vst [vmem:[%s1417 + $0x60] sm:$0xf] %v1442
                  %v1444 = vld [vmem:[%s1416 + $0x34] sm:$0xf]
                  %1445 = vst [vmem:[%s1417 + $0x68] sm:$0xf] %v1444
                  %v1446 = vld [vmem:[%s1416 + $0x38] sm:$0xf]
                  %1447 = vst [vmem:[%s1417 + $0x70] sm:$0xf] %v1446
                  %v1448 = vld [vmem:[%s1416 + $0x3c] sm:$0xf]
                  %1449 = vst [vmem:[%s1417 + $0x78] sm:$0xf] %v1448
                $region211: #{_lambda_.3} parent=198 // loop_footer
                  %s1415 = sadd.s32 1, %s1411
                $region212: #{_lambda_.3} parent=198 // loop_footer_branch
                  %1410 = sbr.rel target = $region208
                $region213: #{_lambda_.3} parent=198 // loop_exit
                  _
              $region199: #{_lambda_.3} parent=183 // pred_fallthru
                _
            $region184: #{_lambda_.3} parent=179 // pred_fallthru
              _
            // Predicated region
            $region185: #{_lambda_.3} parent=179 // pred_check
              _
            $region186: #{_lambda_.3} parent=179 // pred_check_branch
              %1357 = sbr.rel (0) target = $region188
            $region187: #{_lambda_.3} parent=179 // pred_region
              loop: start=0, step=1, limit=1
              $region189: #{_lambda_.3} parent=187 // loop_pre_header
                _
              $region190: #{_lambda_.3} parent=187 // loop_header
                %s1360 = sphi 0, %s1364
                %p1361 = scmp.ge.s32.totalorder %s1360, 1
                %s1365 = sphi %s1344, %s1344
                %s1366 = sphi %s1351, %s1351
              $region191: #{_lambda_.3} parent=187 // loop_header_branch
                %1363 = sbr.rel (%p1361) target = $region195
              $region192: #{_lambda_.3} parent=187 // loop_body
                %v1367 = vld [vmem:[%s1365] sm:$0xf]
                %1368 = vst [vmem:[%s1366] sm:$0xf] %v1367
                %v1369 = vld [vmem:[%s1365 + $0x4] sm:$0xf]
                %1370 = vst [vmem:[%s1366 + $0x8] sm:$0xf] %v1369
                %v1371 = vld [vmem:[%s1365 + $0x8] sm:$0xf]
                %1372 = vst [vmem:[%s1366 + $0x10] sm:$0xf] %v1371
                %v1373 = vld [vmem:[%s1365 + $0xc] sm:$0xf]
                %1374 = vst [vmem:[%s1366 + $0x18] sm:$0xf] %v1373
                %v1375 = vld [vmem:[%s1365 + $0x10] sm:$0xf]
                %1376 = vst [vmem:[%s1366 + $0x20] sm:$0xf] %v1375
                %v1377 = vld [vmem:[%s1365 + $0x14] sm:$0xf]
                %1378 = vst [vmem:[%s1366 + $0x28] sm:$0xf] %v1377
                %v1379 = vld [vmem:[%s1365 + $0x18] sm:$0xf]
                %1380 = vst [vmem:[%s1366 + $0x30] sm:$0xf] %v1379
                %v1381 = vld [vmem:[%s1365 + $0x1c] sm:$0xf]
                %1382 = vst [vmem:[%s1366 + $0x38] sm:$0xf] %v1381
                %v1383 = vld [vmem:[%s1365 + $0x20] sm:$0xf]
                %1384 = vst [vmem:[%s1366 + $0x40] sm:$0xf] %v1383
                %v1385 = vld [vmem:[%s1365 + $0x24] sm:$0xf]
                %1386 = vst [vmem:[%s1366 + $0x48] sm:$0xf] %v1385
                %v1387 = vld [vmem:[%s1365 + $0x28] sm:$0xf]
                %1388 = vst [vmem:[%s1366 + $0x50] sm:$0xf] %v1387
                %v1389 = vld [vmem:[%s1365 + $0x2c] sm:$0xf]
                %1390 = vst [vmem:[%s1366 + $0x58] sm:$0xf] %v1389
                %v1391 = vld [vmem:[%s1365 + $0x30] sm:$0xf]
                %1392 = vst [vmem:[%s1366 + $0x60] sm:$0xf] %v1391
                %v1393 = vld [vmem:[%s1365 + $0x34] sm:$0xf]
                %1394 = vst [vmem:[%s1366 + $0x68] sm:$0xf] %v1393
                %v1395 = vld [vmem:[%s1365 + $0x38] sm:$0xf]
                %1396 = vst [vmem:[%s1366 + $0x70] sm:$0xf] %v1395
                %v1397 = vld [vmem:[%s1365 + $0x3c] sm:$0xf]
                %1398 = vst [vmem:[%s1366 + $0x78] sm:$0xf] %v1397
              $region193: #{_lambda_.3} parent=187 // loop_footer
                %s1364 = sadd.s32 1, %s1360
              $region194: #{_lambda_.3} parent=187 // loop_footer_branch
                %1359 = sbr.rel target = $region190
              $region195: #{_lambda_.3} parent=187 // loop_exit
                _
            $region188: #{_lambda_.3} parent=179 // pred_fallthru
              _
          $region180: #{_lambda_.3} parent=175 // pred_fallthru
            _
          %1450 = vnop
        $region176: #{_lambda_.3} parent=159 // pred_fallthru
          _
      $region160: #{_lambda_.3} parent=5 // pred_fallthru
        _
      %p1451 = scmp.le.s32.totalorder 2, %s14
      // Predicated region
      $region214: #{_lambda_.3} parent=5 // pred_check
        %p1452 = pneg %p1451
      $region215: #{_lambda_.3} parent=5 // pred_check_branch
        %1454 = sbr.rel (%p1452) target = $region217
      $region216: #{_lambda_.3} parent=5 // pred_region
        %s1455 = ssub.s32 %s14, 2
        // Predicated region
        $region218: #{_lambda_.3} parent=216 // pred_check
          %p1456 = pneg %p246
        $region219: #{_lambda_.3} parent=216 // pred_check_branch
          %1458 = sbr.rel (%p1456) target = $region221
        $region220: #{_lambda_.3} parent=216 // pred_region
          %s1459 = sand.u32 %s231, 1
          %s1460 = sand.u32 %s231, 1
          %s1461 = smul.addr %s1460, 64
          %s1462 = scalar_lea.vmem [#allocation5], %s1461
        $region221: #{_lambda_.3} parent=216 // pred_fallthru
          _
      $region217: #{_lambda_.3} parent=5 // pred_fallthru
        _
    $region6: #{_lambda_.3} parent=1 // loop_footer
      %s18 = sadd.s32 1, %s14
    $region7: #{_lambda_.3} parent=1 // loop_footer_branch
      %13 = sbr.rel target = $region3
    $region8: #{_lambda_.3} parent=1 // loop_exit
      _

</llo_original>
